<compile_context>
chip_gen: v5e
topology: v5e:2x2
jax: 0.10.0
libtpu: 0.0.40
codegen_flags: <defaults>
</compile_context>

<pallas_src>
import functools

import numpy as np

import jax
import jax.numpy as jnp
from jax.experimental import pallas as pl
from jax.experimental.pallas import tpu as pltpu


# ----------------------------------------------------------------------------
# Pallas kernel: out = act((A @ W) + bias[None, :])   (A, W in bf16, acc in f32)
# ----------------------------------------------------------------------------
def _round_up(x, m):
    return ((x + m - 1) // m) * m


def _gemm_bias_act_kernel(a_ref, w_ref, b_ref, o_ref, *, act):
    acc = jnp.dot(a_ref[...], w_ref[...], preferred_element_type=jnp.float32)
    y = acc + b_ref[...]
    if act == "relu":
        y = jnp.maximum(y, 0.0)
    elif act == "leaky":                      # F.leaky_relu(x, 0.2)
        y = jnp.where(y >= 0.0, y, 0.2 * y)
    elif act == "sigmoid_clamp":              # sigmoid then clamp(0, 1)
        y = jnp.clip(jax.nn.sigmoid(y), 0.0, 1.0)
    o_ref[...] = y.astype(o_ref.dtype)


def gemm_bias_act(a, w, bias, act="none", out_dtype=jnp.float32):
    """act(a @ w + bias) with a:(M,K), w:(K,N) bf16-packed, bias:(N,) f32."""
    M, K = a.shape
    K2, N = w.shape
    assert K == K2

    a = a.astype(jnp.bfloat16)
    w = w.astype(jnp.bfloat16)
    b2 = bias.astype(jnp.float32).reshape(1, N)

    if M <= 512:
        # Single block: block shape == full array dims, no padding needed.
        TM, Mp = M, M
        a_p = a
    else:
        TM = 256
        Mp = _round_up(M, TM)
        a_p = jnp.pad(a, ((0, Mp - M), (0, 0))) if Mp != M else a

    out = pl.pallas_call(
        functools.partial(_gemm_bias_act_kernel, act=act),
        out_shape=jax.ShapeDtypeStruct((Mp, N), out_dtype),
        grid=(Mp // TM,),
        in_specs=[
            pl.BlockSpec((TM, K), lambda i: (i, 0)),
            pl.BlockSpec((K, N), lambda i: (0, 0)),
            pl.BlockSpec((1, N), lambda i: (0, 0)),
        ],
        out_specs=pl.BlockSpec((TM, N), lambda i: (i, 0)),
        compiler_params=pltpu.CompilerParams(
            dimension_semantics=("parallel",),
            vmem_limit_bytes=32 * 1024 * 1024,
        ),
    )(a_p, w, b2)
    return out if Mp == M else out[:M]


# ----------------------------------------------------------------------------
# im2col glue (plain JAX; static slices only)
# ----------------------------------------------------------------------------
def _im2col(x, k, stride, pad):
    # x: (B, H, W, C) -> patches (B*OH*OW, k*k*C) with feature order (kh, kw, c)
    B, H, W, C = x.shape
    xp = jnp.pad(x, ((0, 0), (pad, pad), (pad, pad), (0, 0)))
    OH = (H + 2 * pad - k) // stride + 1
    OW = (W + 2 * pad - k) // stride + 1
    cols = []
    for kh in range(k):
        for kw in range(k):
            cols.append(xp[:, kh:kh + stride * OH:stride, kw:kw + stride * OW:stride, :])
    patches = jnp.stack(cols, axis=3)  # (B, OH, OW, k*k, C)
    return patches.reshape(B * OH * OW, k * k * C), OH, OW


def conv2d_gemm(x_nhwc, w_packed, bias, act, *, k, stride, pad, out_dtype):
    # w_packed: (k*k*IC, OC) bf16, BN scale already folded in.
    B = x_nhwc.shape[0]
    OC = w_packed.shape[1]
    patches, OH, OW = _im2col(x_nhwc, k, stride, pad)
    y = gemm_bias_act(patches, w_packed, bias, act, out_dtype)
    return y.reshape(B, OH, OW, OC)


def deconv2d_phase_gemm(x_nhwc, w_packed, bias, act, *, out_dtype):
    # ConvTranspose2d(k=4, s=2, p=1) via sub-pixel phase decomposition:
    # one GEMM over 3x3 stride-1 patches with a (9*IC, 4*OC) phase weight,
    # then interleave the 4 output phases into the 2x upsampled grid.
    B, H, W, _ = x_nhwc.shape
    OC = w_packed.shape[1] // 4
    patches, _, _ = _im2col(x_nhwc, 3, 1, 1)                   # (B*H*W, 9*IC)
    y = gemm_bias_act(patches, w_packed, bias, act, out_dtype)  # (B*H*W, 4*OC)
    y = y.reshape(B, H, W, 2, 2, OC)                            # (b, a, c, ry, rx, oc)
    y = jnp.transpose(y, (0, 1, 3, 2, 4, 5)).reshape(B, 2 * H, 2 * W, OC)
    return y


def _fold_bn(layer, eps=1e-5):
    # eval-mode BatchNorm folded with the preceding conv bias:
    #   BN(conv + b) = scale*conv + (scale*(b - running_mean) + beta)
    scale = layer["gamma"] * jax.lax.rsqrt(layer["rv"] + eps)
    shift = scale * (layer["b"] - layer["rm"]) + layer["beta"]
    return scale, shift


# ----------------------------------------------------------------------------
# One-time parameter packing (all transposes / flips / folds done here)
# ----------------------------------------------------------------------------
# For output phase r (0/1) along an axis, output[2a+r] reads the 3-window
# {a-1, a, a+1} at window positions/taps:
#   r=0: (window 0, kh=3), (window 1, kh=1)
#   r=1: (window 1, kh=2), (window 2, kh=0)
_PHASE_TAPS = {0: ((0, 3), (1, 1)), 1: ((1, 2), (2, 0))}


def _pack_deconv_phase(w_t, scale):
    # w_t: ConvTranspose2d weight (IC, OC, 4, 4); returns (9*IC, 4*OC) bf16.
    IC, OC = w_t.shape[0], w_t.shape[1]
    phases = []
    for ry in (0, 1):
        for rx in (0, 1):
            wp = jnp.zeros((3, 3, IC, OC), jnp.float32)
            for wr, kh in _PHASE_TAPS[ry]:
                for wc, kw in _PHASE_TAPS[rx]:
                    wp = wp.at[wr, wc].set(w_t[:, :, kh, kw].astype(jnp.float32))
            phases.append(wp.reshape(9 * IC, OC) * scale[None, :])
    return jnp.concatenate(phases, axis=1).astype(jnp.bfloat16)


def pack_params(params, cfg):
    packed = {"conv": [], "deconv": []}

    # Encoder convs: im2col weight (kh, kw, ic) x OC, BN scale folded in.
    for layer in params["conv"]:
        scale, shift = _fold_bn(layer)
        w = layer["w"]                                            # (OC, IC, 4, 4)
        w2 = jnp.transpose(w, (2, 3, 1, 0)).reshape(-1, w.shape[0])
        packed["conv"].append(dict(
            w=(w2 * scale[None, :]).astype(jnp.bfloat16),
            b=shift.astype(jnp.float32)))

    # fc1 / fc2 fused along N; columns permuted so the GEMM consumes the
    # NHWC-flattened activations directly (PyTorch flattens NCHW).
    C, S = cfg["d_max"], cfg["last_size"]
    perm = np.transpose(np.arange(C * S * S).reshape(C, S, S), (1, 2, 0))
    perm = perm.reshape(-1).astype(np.int32)        # NHWC position -> NCHW index
    fc_w = jnp.concatenate(
        [params["fc1_w"][:, perm].T, params["fc2_w"][:, perm].T], axis=1)
    packed["fc_w"] = fc_w.astype(jnp.bfloat16)                    # (num_linear, 2*z)
    packed["fc_b"] = jnp.concatenate(
        [params["fc1_b"], params["fc2_b"]]).astype(jnp.float32)

    # d1: output columns permuted to NHWC-flat order (avoids per-call transpose).
    packed["d1_w"] = params["d1_w"][perm, :].T.astype(jnp.bfloat16)  # (z, num_linear)
    packed["d1_b"] = params["d1_b"][perm].astype(jnp.float32)

    # Decoder deconvs: phase-decomposed weights, BN scale folded in.
    for layer in params["deconv"]:
        scale, shift = _fold_bn(layer)
        packed["deconv"].append(dict(
            w=_pack_deconv_phase(layer["w"], scale),
            b=jnp.tile(shift, 4).astype(jnp.float32)))
    fl = params["deconv_final"]
    oc = fl["w"].shape[1]
    packed["deconv_final"] = dict(
        w=_pack_deconv_phase(fl["w"], jnp.ones((oc,), jnp.float32)),
        b=jnp.tile(fl["b"], 4).astype(jnp.float32))
    return packed


# ----------------------------------------------------------------------------
# Parameter init (deterministic, mirrors MaskedVAE._setup_model shapes)
# ----------------------------------------------------------------------------
def init_masked_vae(key, *, z_dim, in_shape, layer_count, channels, d):
    keys = iter(jax.random.split(key, 4 * layer_count + 16))

    def nrm(shape, std=0.05):
        return std * jax.random.normal(next(keys), shape, jnp.float32)

    params = {"conv": [], "deconv": []}
    inputs, mul, size = channels, 1, in_shape
    for _ in range(layer_count):
        oc = d * mul
        params["conv"].append(dict(
            w=nrm((oc, inputs, 4, 4)), b=jnp.zeros((oc,), jnp.float32),
            gamma=jnp.ones((oc,), jnp.float32), beta=jnp.zeros((oc,), jnp.float32),
            rm=jnp.zeros((oc,), jnp.float32), rv=jnp.ones((oc,), jnp.float32)))
        inputs = oc
        mul *= 2
        size = (size + 2 * 1 - 4) // 2 + 1       # conv2d_output_shape(k=4,s=2,p=1)

    d_max, last_size = inputs, size
    num_linear = last_size * last_size * d_max

    params["fc1_w"] = nrm((z_dim, num_linear)); params["fc1_b"] = nrm((z_dim,), 0.01)
    params["fc2_w"] = nrm((z_dim, num_linear)); params["fc2_b"] = nrm((z_dim,), 0.01)
    params["d1_w"] = nrm((num_linear, z_dim));  params["d1_b"] = nrm((num_linear,), 0.01)

    mul = inputs // d // 2
    for _ in range(1, layer_count):
        oc = d * mul
        params["deconv"].append(dict(
            w=nrm((inputs, oc, 4, 4)), b=jnp.zeros((oc,), jnp.float32),
            gamma=jnp.ones((oc,), jnp.float32), beta=jnp.zeros((oc,), jnp.float32),
            rm=jnp.zeros((oc,), jnp.float32), rv=jnp.ones((oc,), jnp.float32)))
        inputs = oc
        mul //= 2
    params["deconv_final"] = dict(w=nrm((inputs, channels, 4, 4)),
                                  b=jnp.zeros((channels,), jnp.float32))

    cfg = dict(z_dim=z_dim, d_max=d_max, last_size=last_size,
               num_linear=num_linear, layer_count=layer_count, channels=channels)
    return params, cfg


# ----------------------------------------------------------------------------
# Forward pass == MaskedVAE.forward (eval-mode semantics)
# ----------------------------------------------------------------------------
def masked_vae_forward(packed, x_nchw, *, cfg):
    B = x_nchw.shape[0]
    zd = cfg["z_dim"]
    x = jnp.transpose(x_nchw, (0, 2, 3, 1)).astype(jnp.bfloat16)   # NCHW -> NHWC

    # ---- encode: conv -> BN -> relu, repeated layer_count times ----
    for layer in packed["conv"]:
        x = conv2d_gemm(x, layer["w"], layer["b"], "relu",
                        k=4, stride=2, pad=1, out_dtype=jnp.bfloat16)

    # flatten in NHWC order; fc weights were column-permuted at pack time to
    # match PyTorch's NCHW-flat view.  mu / logvar computed by one fused GEMM.
    x_flat = x.reshape(B, cfg["num_linear"])
    h = gemm_bias_act(x_flat, packed["fc_w"], packed["fc_b"], "none",
                      out_dtype=jnp.float32)
    mu = h[:, :zd].reshape(B, -1)
    logvar = h[:, zd:].reshape(B, -1)
    z = mu                         # reparameterize in eval mode -> z = mu

    # ---- decode ----
    # d1 followed (after a value-preserving view) by leaky_relu(0.2): fused.
    hdec = gemm_bias_act(z.astype(jnp.bfloat16), packed["d1_w"], packed["d1_b"],
                         "leaky", out_dtype=jnp.bfloat16)
    hdec = hdec.reshape(B, cfg["last_size"], cfg["last_size"], cfg["d_max"])  # NHWC

    for layer in packed["deconv"]:
        hdec = deconv2d_phase_gemm(hdec, layer["w"], layer["b"], "leaky",
                                   out_dtype=jnp.bfloat16)
    fl = packed["deconv_final"]
    hdec = deconv2d_phase_gemm(hdec, fl["w"], fl["b"], "sigmoid_clamp",
                               out_dtype=jnp.float32)

    recon = jnp.transpose(hdec, (0, 3, 1, 2))  # NHWC -> NCHW
    return mu, logvar, z, recon


# ----------------------------------------------------------------------------
if __name__ == "__main__":
    key = jax.random.PRNGKey(0)
    pkey, xkey = jax.random.split(key)

    # small config: z_dim=8, in_shape=16, layer_count=4, channels=1, d=8
    params, cfg = init_masked_vae(pkey, z_dim=8, in_shape=16,
                                  layer_count=4, channels=1, d=8)
    packed = pack_params(params, cfg)          # one-time weight packing

    x = jax.random.normal(xkey, (2, 1, 16, 16), jnp.float32)

    fwd = jax.jit(functools.partial(masked_vae_forward, cfg=cfg))
    mu, logvar, z, recon = fwd(packed, x)
    jax.block_until_ready((mu, logvar, z, recon))

    assert mu.shape == (2, 8)
    assert logvar.shape == (2, 8)
    assert z.shape == (2, 8)
    assert recon.shape == (2, 1, 16, 16)
    assert bool(jnp.all(jnp.isfinite(recon)))
    assert bool(jnp.all((recon >= 0.0) & (recon <= 1.0)))
    print("KERNEL_OK")
</pallas_src>

<mosaic_0001>
module attributes {stable_mosaic.version = 11 : i64} {
  func.func @_gemm_bias_act_kernel(%arg0: i32, %arg1: memref<128x16xbf16, #tpu.memory_space<vmem>>, %arg2: memref<16x8xbf16, #tpu.memory_space<vmem>>, %arg3: memref<1x8xf32, #tpu.memory_space<vmem>>, %arg4: memref<128x8xbf16, #tpu.memory_space<vmem>>) attributes {dimension_semantics = [#tpu.dimension_semantics<parallel>], iteration_bounds = array<i64: 1>, scalar_prefetch = 0 : i64, scratch_operands = 0 : i64, tpu.core_type = #tpu.core_type<tc>, window_params = [{transform_indices = @transform_0, window_bounds = array<i64: 128, 16>}, {pipeline_mode = #tpu.pipeline_mode<synchronous>, transform_indices = @transform_1, window_bounds = array<i64: 16, 8>}, {pipeline_mode = #tpu.pipeline_mode<synchronous>, transform_indices = @transform_2, window_bounds = array<i64: 1, 8>}, {transform_indices = @transform_3, window_bounds = array<i64: 128, 8>}]} {
    %c0 = arith.constant 0 : index
    %c0_0 = arith.constant 0 : index
    %0 = vector.load %arg1[%c0, %c0_0] : memref<128x16xbf16, #tpu.memory_space<vmem>>, vector<128x16xbf16>
    %c0_1 = arith.constant 0 : index
    %c0_2 = arith.constant 0 : index
    %1 = vector.load %arg2[%c0_1, %c0_2] : memref<16x8xbf16, #tpu.memory_space<vmem>>, vector<16x8xbf16>
    %cst = arith.constant dense<0.000000e+00> : vector<128x8xf32>
    %2 = tpu.matmul %0, %1, %cst {dimension_numbers = #tpu.dot_dimension_numbers<[1], [0], [0], [1], [0, 0, 1, 1], [], []>} : vector<128x16xbf16>, vector<16x8xbf16>, vector<128x8xf32> -> vector<128x8xf32>
    %c0_3 = arith.constant 0 : index
    %c0_4 = arith.constant 0 : index
    %3 = vector.load %arg3[%c0_3, %c0_4] : memref<1x8xf32, #tpu.memory_space<vmem>>, vector<1x8xf32>
    %4 = vector.broadcast %3 : vector<1x8xf32> to vector<128x8xf32>
    %5 = arith.addf %2, %4 : vector<128x8xf32>
    %cst_5 = arith.constant 0.000000e+00 : f32
    %6 = vector.broadcast %cst_5 : f32 to vector<128x8xf32>
    %7 = arith.maximumf %5, %6 : vector<128x8xf32>
    %8 = arith.truncf %7 : vector<128x8xf32> to vector<128x8xbf16>
    %c0_6 = arith.constant 0 : index
    %c0_7 = arith.constant 0 : index
    %9 = vector.load %arg4[%c0_6, %c0_7] : memref<128x8xbf16, #tpu.memory_space<vmem>>, vector<128x8xbf16>
    tpu.vector_store %arg4[%c0_6, %c0_7], %8 {strides = array<i32>} : memref<128x8xbf16, #tpu.memory_space<vmem>>, vector<128x8xbf16>,
    return
  }
  func.func @transform_0(%arg0: i32) -> (i32, i32) {
    %c0_i32 = arith.constant 0 : i32
    %c0_i32_0 = arith.constant 0 : i32
    return %arg0, %c0_i32 : i32, i32
  }
  func.func @transform_1(%arg0: i32) -> (i32, i32) {
    %c0_i32 = arith.constant 0 : i32
    %c0_i32_0 = arith.constant 0 : i32
    %c0_i32_1 = arith.constant 0 : i32
    return %c0_i32, %c0_i32_0 : i32, i32
  }
  func.func @transform_2(%arg0: i32) -> (i32, i32) {
    %c0_i32 = arith.constant 0 : i32
    %c0_i32_0 = arith.constant 0 : i32
    %c0_i32_1 = arith.constant 0 : i32
    return %c0_i32, %c0_i32_0 : i32, i32
  }
  func.func @transform_3(%arg0: i32) -> (i32, i32) {
    %c0_i32 = arith.constant 0 : i32
    %c0_i32_0 = arith.constant 0 : i32
    return %arg0, %c0_i32 : i32, i32
  }
}

module attributes {stable_mosaic.version = 11 : i64} {
  func.func @_gemm_bias_act_kernel(%arg0: i32, %arg1: memref<32x128xbf16, #tpu.memory_space<vmem>>, %arg2: memref<128x16xbf16, #tpu.memory_space<vmem>>, %arg3: memref<1x16xf32, #tpu.memory_space<vmem>>, %arg4: memref<32x16xbf16, #tpu.memory_space<vmem>>) attributes {dimension_semantics = [#tpu.dimension_semantics<parallel>], iteration_bounds = array<i64: 1>, scalar_prefetch = 0 : i64, scratch_operands = 0 : i64, tpu.core_type = #tpu.core_type<tc>, window_params = [{transform_indices = @transform_0, window_bounds = array<i64: 32, 128>}, {pipeline_mode = #tpu.pipeline_mode<synchronous>, transform_indices = @transform_1, window_bounds = array<i64: 128, 16>}, {pipeline_mode = #tpu.pipeline_mode<synchronous>, transform_indices = @transform_2, window_bounds = array<i64: 1, 16>}, {transform_indices = @transform_3, window_bounds = array<i64: 32, 16>}]} {
    %c0 = arith.constant 0 : index
    %c0_0 = arith.constant 0 : index
    %0 = vector.load %arg1[%c0, %c0_0] : memref<32x128xbf16, #tpu.memory_space<vmem>>, vector<32x128xbf16>
    %c0_1 = arith.constant 0 : index
    %c0_2 = arith.constant 0 : index
    %1 = vector.load %arg2[%c0_1, %c0_2] : memref<128x16xbf16, #tpu.memory_space<vmem>>, vector<128x16xbf16>
    %cst = arith.constant dense<0.000000e+00> : vector<32x16xf32>
    %2 = tpu.matmul %0, %1, %cst {dimension_numbers = #tpu.dot_dimension_numbers<[1], [0], [0], [1], [0, 0, 1, 1], [], []>} : vector<32x128xbf16>, vector<128x16xbf16>, vector<32x16xf32> -> vector<32x16xf32>
    %c0_3 = arith.constant 0 : index
    %c0_4 = arith.constant 0 : index
    %3 = vector.load %arg3[%c0_3, %c0_4] : memref<1x16xf32, #tpu.memory_space<vmem>>, vector<1x16xf32>
    %4 = vector.broadcast %3 : vector<1x16xf32> to vector<32x16xf32>
    %5 = arith.addf %2, %4 : vector<32x16xf32>
    %cst_5 = arith.constant 0.000000e+00 : f32
    %6 = vector.broadcast %cst_5 : f32 to vector<32x16xf32>
    %7 = arith.maximumf %5, %6 : vector<32x16xf32>
    %8 = arith.truncf %7 : vector<32x16xf32> to vector<32x16xbf16>
    %c0_6 = arith.constant 0 : index
    %c0_7 = arith.constant 0 : index
    %9 = vector.load %arg4[%c0_6, %c0_7] : memref<32x16xbf16, #tpu.memory_space<vmem>>, vector<32x16xbf16>
    tpu.vector_store %arg4[%c0_6, %c0_7], %8 {strides = array<i32>} : memref<32x16xbf16, #tpu.memory_space<vmem>>, vector<32x16xbf16>,
    return
  }
  func.func @transform_0(%arg0: i32) -> (i32, i32) {
    %c0_i32 = arith.constant 0 : i32
    %c0_i32_0 = arith.constant 0 : i32
    return %arg0, %c0_i32 : i32, i32
  }
  func.func @transform_1(%arg0: i32) -> (i32, i32) {
    %c0_i32 = arith.constant 0 : i32
    %c0_i32_0 = arith.constant 0 : i32
    %c0_i32_1 = arith.constant 0 : i32
    return %c0_i32, %c0_i32_0 : i32, i32
  }
  func.func @transform_2(%arg0: i32) -> (i32, i32) {
    %c0_i32 = arith.constant 0 : i32
    %c0_i32_0 = arith.constant 0 : i32
    %c0_i32_1 = arith.constant 0 : i32
    return %c0_i32, %c0_i32_0 : i32, i32
  }
  func.func @transform_3(%arg0: i32) -> (i32, i32) {
    %c0_i32 = arith.constant 0 : i32
    %c0_i32_0 = arith.constant 0 : i32
    return %arg0, %c0_i32 : i32, i32
  }
}

module attributes {stable_mosaic.version = 11 : i64} {
  func.func @_gemm_bias_act_kernel(%arg0: i32, %arg1: memref<8x256xbf16, #tpu.memory_space<vmem>>, %arg2: memref<256x32xbf16, #tpu.memory_space<vmem>>, %arg3: memref<1x32xf32, #tpu.memory_space<vmem>>, %arg4: memref<8x32xbf16, #tpu.memory_space<vmem>>) attributes {dimension_semantics = [#tpu.dimension_semantics<parallel>], iteration_bounds = array<i64: 1>, scalar_prefetch = 0 : i64, scratch_operands = 0 : i64, tpu.core_type = #tpu.core_type<tc>, window_params = [{transform_indices = @transform_0, window_bounds = array<i64: 8, 256>}, {pipeline_mode = #tpu.pipeline_mode<synchronous>, transform_indices = @transform_1, window_bounds = array<i64: 256, 32>}, {pipeline_mode = #tpu.pipeline_mode<synchronous>, transform_indices = @transform_2, window_bounds = array<i64: 1, 32>}, {transform_indices = @transform_3, window_bounds = array<i64: 8, 32>}]} {
    %c0 = arith.constant 0 : index
    %c0_0 = arith.constant 0 : index
    %0 = vector.load %arg1[%c0, %c0_0] : memref<8x256xbf16, #tpu.memory_space<vmem>>, vector<8x256xbf16>
    %c0_1 = arith.constant 0 : index
    %c0_2 = arith.constant 0 : index
    %1 = vector.load %arg2[%c0_1, %c0_2] : memref<256x32xbf16, #tpu.memory_space<vmem>>, vector<256x32xbf16>
    %cst = arith.constant dense<0.000000e+00> : vector<8x32xf32>
    %2 = tpu.matmul %0, %1, %cst {dimension_numbers = #tpu.dot_dimension_numbers<[1], [0], [0], [1], [0, 0, 1, 1], [], []>} : vector<8x256xbf16>, vector<256x32xbf16>, vector<8x32xf32> -> vector<8x32xf32>
    %c0_3 = arith.constant 0 : index
    %c0_4 = arith.constant 0 : index
    %3 = vector.load %arg3[%c0_3, %c0_4] : memref<1x32xf32, #tpu.memory_space<vmem>>, vector<1x32xf32>
    %4 = vector.broadcast %3 : vector<1x32xf32> to vector<8x32xf32>
    %5 = arith.addf %2, %4 : vector<8x32xf32>
    %cst_5 = arith.constant 0.000000e+00 : f32
    %6 = vector.broadcast %cst_5 : f32 to vector<8x32xf32>
    %7 = arith.maximumf %5, %6 : vector<8x32xf32>
    %8 = arith.truncf %7 : vector<8x32xf32> to vector<8x32xbf16>
    %c0_6 = arith.constant 0 : index
    %c0_7 = arith.constant 0 : index
    %9 = vector.load %arg4[%c0_6, %c0_7] : memref<8x32xbf16, #tpu.memory_space<vmem>>, vector<8x32xbf16>
    tpu.vector_store %arg4[%c0_6, %c0_7], %8 {strides = array<i32>} : memref<8x32xbf16, #tpu.memory_space<vmem>>, vector<8x32xbf16>,
    return
  }
  func.func @transform_0(%arg0: i32) -> (i32, i32) {
    %c0_i32 = arith.constant 0 : i32
    %c0_i32_0 = arith.constant 0 : i32
    return %arg0, %c0_i32 : i32, i32
  }
  func.func @transform_1(%arg0: i32) -> (i32, i32) {
    %c0_i32 = arith.constant 0 : i32
    %c0_i32_0 = arith.constant 0 : i32
    %c0_i32_1 = arith.constant 0 : i32
    return %c0_i32, %c0_i32_0 : i32, i32
  }
  func.func @transform_2(%arg0: i32) -> (i32, i32) {
    %c0_i32 = arith.constant 0 : i32
    %c0_i32_0 = arith.constant 0 : i32
    %c0_i32_1 = arith.constant 0 : i32
    return %c0_i32, %c0_i32_0 : i32, i32
  }
  func.func @transform_3(%arg0: i32) -> (i32, i32) {
    %c0_i32 = arith.constant 0 : i32
    %c0_i32_0 = arith.constant 0 : i32
    return %arg0, %c0_i32 : i32, i32
  }
}

module attributes {stable_mosaic.version = 11 : i64} {
  func.func @_gemm_bias_act_kernel(%arg0: i32, %arg1: memref<2x512xbf16, #tpu.memory_space<vmem>>, %arg2: memref<512x64xbf16, #tpu.memory_space<vmem>>, %arg3: memref<1x64xf32, #tpu.memory_space<vmem>>, %arg4: memref<2x64xbf16, #tpu.memory_space<vmem>>) attributes {dimension_semantics = [#tpu.dimension_semantics<parallel>], iteration_bounds = array<i64: 1>, scalar_prefetch = 0 : i64, scratch_operands = 0 : i64, tpu.core_type = #tpu.core_type<tc>, window_params = [{transform_indices = @transform_0, window_bounds = array<i64: 2, 512>}, {pipeline_mode = #tpu.pipeline_mode<synchronous>, transform_indices = @transform_1, window_bounds = array<i64: 512, 64>}, {pipeline_mode = #tpu.pipeline_mode<synchronous>, transform_indices = @transform_2, window_bounds = array<i64: 1, 64>}, {transform_indices = @transform_3, window_bounds = array<i64: 2, 64>}]} {
    %c0 = arith.constant 0 : index
    %c0_0 = arith.constant 0 : index
    %0 = vector.load %arg1[%c0, %c0_0] : memref<2x512xbf16, #tpu.memory_space<vmem>>, vector<2x512xbf16>
    %c0_1 = arith.constant 0 : index
    %c0_2 = arith.constant 0 : index
    %1 = vector.load %arg2[%c0_1, %c0_2] : memref<512x64xbf16, #tpu.memory_space<vmem>>, vector<512x64xbf16>
    %cst = arith.constant dense<0.000000e+00> : vector<2x64xf32>
    %2 = tpu.matmul %0, %1, %cst {dimension_numbers = #tpu.dot_dimension_numbers<[1], [0], [0], [1], [0, 0, 1, 1], [], []>} : vector<2x512xbf16>, vector<512x64xbf16>, vector<2x64xf32> -> vector<2x64xf32>
    %c0_3 = arith.constant 0 : index
    %c0_4 = arith.constant 0 : index
    %3 = vector.load %arg3[%c0_3, %c0_4] : memref<1x64xf32, #tpu.memory_space<vmem>>, vector<1x64xf32>
    %4 = vector.broadcast %3 : vector<1x64xf32> to vector<2x64xf32>
    %5 = arith.addf %2, %4 : vector<2x64xf32>
    %cst_5 = arith.constant 0.000000e+00 : f32
    %6 = vector.broadcast %cst_5 : f32 to vector<2x64xf32>
    %7 = arith.maximumf %5, %6 : vector<2x64xf32>
    %8 = arith.truncf %7 : vector<2x64xf32> to vector<2x64xbf16>
    %c0_6 = arith.constant 0 : index
    %c0_7 = arith.constant 0 : index
    %9 = vector.load %arg4[%c0_6, %c0_7] : memref<2x64xbf16, #tpu.memory_space<vmem>>, vector<2x64xbf16>
    tpu.vector_store %arg4[%c0_6, %c0_7], %8 {strides = array<i32>} : memref<2x64xbf16, #tpu.memory_space<vmem>>, vector<2x64xbf16>,
    return
  }
  func.func @transform_0(%arg0: i32) -> (i32, i32) {
    %c0_i32 = arith.constant 0 : i32
    %c0_i32_0 = arith.constant 0 : i32
    return %arg0, %c0_i32 : i32, i32
  }
  func.func @transform_1(%arg0: i32) -> (i32, i32) {
    %c0_i32 = arith.constant 0 : i32
    %c0_i32_0 = arith.constant 0 : i32
    %c0_i32_1 = arith.constant 0 : i32
    return %c0_i32, %c0_i32_0 : i32, i32
  }
  func.func @transform_2(%arg0: i32) -> (i32, i32) {
    %c0_i32 = arith.constant 0 : i32
    %c0_i32_0 = arith.constant 0 : i32
    %c0_i32_1 = arith.constant 0 : i32
    return %c0_i32, %c0_i32_0 : i32, i32
  }
  func.func @transform_3(%arg0: i32) -> (i32, i32) {
    %c0_i32 = arith.constant 0 : i32
    %c0_i32_0 = arith.constant 0 : i32
    return %arg0, %c0_i32 : i32, i32
  }
}

module attributes {stable_mosaic.version = 11 : i64} {
  func.func @_gemm_bias_act_kernel(%arg0: i32, %arg1: memref<2x64xbf16, #tpu.memory_space<vmem>>, %arg2: memref<64x16xbf16, #tpu.memory_space<vmem>>, %arg3: memref<1x16xf32, #tpu.memory_space<vmem>>, %arg4: memref<2x16xf32, #tpu.memory_space<vmem>>) attributes {dimension_semantics = [#tpu.dimension_semantics<parallel>], iteration_bounds = array<i64: 1>, scalar_prefetch = 0 : i64, scratch_operands = 0 : i64, tpu.core_type = #tpu.core_type<tc>, window_params = [{transform_indices = @transform_0, window_bounds = array<i64: 2, 64>}, {pipeline_mode = #tpu.pipeline_mode<synchronous>, transform_indices = @transform_1, window_bounds = array<i64: 64, 16>}, {pipeline_mode = #tpu.pipeline_mode<synchronous>, transform_indices = @transform_2, window_bounds = array<i64: 1, 16>}, {transform_indices = @transform_3, window_bounds = array<i64: 2, 16>}]} {
    %c0 = arith.constant 0 : index
    %c0_0 = arith.constant 0 : index
    %0 = vector.load %arg1[%c0, %c0_0] : memref<2x64xbf16, #tpu.memory_space<vmem>>, vector<2x64xbf16>
    %c0_1 = arith.constant 0 : index
    %c0_2 = arith.constant 0 : index
    %1 = vector.load %arg2[%c0_1, %c0_2] : memref<64x16xbf16, #tpu.memory_space<vmem>>, vector<64x16xbf16>
    %cst = arith.constant dense<0.000000e+00> : vector<2x16xf32>
    %2 = tpu.matmul %0, %1, %cst {dimension_numbers = #tpu.dot_dimension_numbers<[1], [0], [0], [1], [0, 0, 1, 1], [], []>} : vector<2x64xbf16>, vector<64x16xbf16>, vector<2x16xf32> -> vector<2x16xf32>
    %c0_3 = arith.constant 0 : index
    %c0_4 = arith.constant 0 : index
    %3 = vector.load %arg3[%c0_3, %c0_4] : memref<1x16xf32, #tpu.memory_space<vmem>>, vector<1x16xf32>
    %4 = vector.broadcast %3 : vector<1x16xf32> to vector<2x16xf32>
    %5 = arith.addf %2, %4 : vector<2x16xf32>
    %c0_5 = arith.constant 0 : index
    %c0_6 = arith.constant 0 : index
    %6 = vector.load %arg4[%c0_5, %c0_6] : memref<2x16xf32, #tpu.memory_space<vmem>>, vector<2x16xf32>
    tpu.vector_store %arg4[%c0_5, %c0_6], %5 {strides = array<i32>} : memref<2x16xf32, #tpu.memory_space<vmem>>, vector<2x16xf32>,
    return
  }
  func.func @transform_0(%arg0: i32) -> (i32, i32) {
    %c0_i32 = arith.constant 0 : i32
    %c0_i32_0 = arith.constant 0 : i32
    return %arg0, %c0_i32 : i32, i32
  }
  func.func @transform_1(%arg0: i32) -> (i32, i32) {
    %c0_i32 = arith.constant 0 : i32
    %c0_i32_0 = arith.constant 0 : i32
    %c0_i32_1 = arith.constant 0 : i32
    return %c0_i32, %c0_i32_0 : i32, i32
  }
  func.func @transform_2(%arg0: i32) -> (i32, i32) {
    %c0_i32 = arith.constant 0 : i32
    %c0_i32_0 = arith.constant 0 : i32
    %c0_i32_1 = arith.constant 0 : i32
    return %c0_i32, %c0_i32_0 : i32, i32
  }
  func.func @transform_3(%arg0: i32) -> (i32, i32) {
    %c0_i32 = arith.constant 0 : i32
    %c0_i32_0 = arith.constant 0 : i32
    return %arg0, %c0_i32 : i32, i32
  }
}

module attributes {stable_mosaic.version = 11 : i64} {
  func.func @_gemm_bias_act_kernel(%arg0: i32, %arg1: memref<2x8xbf16, #tpu.memory_space<vmem>>, %arg2: memref<8x64xbf16, #tpu.memory_space<vmem>>, %arg3: memref<1x64xf32, #tpu.memory_space<vmem>>, %arg4: memref<2x64xbf16, #tpu.memory_space<vmem>>) attributes {dimension_semantics = [#tpu.dimension_semantics<parallel>], iteration_bounds = array<i64: 1>, scalar_prefetch = 0 : i64, scratch_operands = 0 : i64, tpu.core_type = #tpu.core_type<tc>, window_params = [{transform_indices = @transform_0, window_bounds = array<i64: 2, 8>}, {pipeline_mode = #tpu.pipeline_mode<synchronous>, transform_indices = @transform_1, window_bounds = array<i64: 8, 64>}, {pipeline_mode = #tpu.pipeline_mode<synchronous>, transform_indices = @transform_2, window_bounds = array<i64: 1, 64>}, {transform_indices = @transform_3, window_bounds = array<i64: 2, 64>}]} {
    %c0 = arith.constant 0 : index
    %c0_0 = arith.constant 0 : index
    %0 = vector.load %arg1[%c0, %c0_0] : memref<2x8xbf16, #tpu.memory_space<vmem>>, vector<2x8xbf16>
    %c0_1 = arith.constant 0 : index
    %c0_2 = arith.constant 0 : index
    %1 = vector.load %arg2[%c0_1, %c0_2] : memref<8x64xbf16, #tpu.memory_space<vmem>>, vector<8x64xbf16>
    %cst = arith.constant dense<0.000000e+00> : vector<2x64xf32>
    %2 = tpu.matmul %0, %1, %cst {dimension_numbers = #tpu.dot_dimension_numbers<[1], [0], [0], [1], [0, 0, 1, 1], [], []>} : vector<2x8xbf16>, vector<8x64xbf16>, vector<2x64xf32> -> vector<2x64xf32>
    %c0_3 = arith.constant 0 : index
    %c0_4 = arith.constant 0 : index
    %3 = vector.load %arg3[%c0_3, %c0_4] : memref<1x64xf32, #tpu.memory_space<vmem>>, vector<1x64xf32>
    %4 = vector.broadcast %3 : vector<1x64xf32> to vector<2x64xf32>
    %5 = arith.addf %2, %4 : vector<2x64xf32>
    %cst_5 = arith.constant 0.000000e+00 : f32
    %6 = vector.broadcast %cst_5 : f32 to vector<2x64xf32>
    %7 = arith.cmpf oge, %5, %6 : vector<2x64xf32>
    %cst_6 = arith.constant 2.000000e-01 : f32
    %8 = vector.broadcast %cst_6 : f32 to vector<2x64xf32>
    %9 = arith.mulf %8, %5 : vector<2x64xf32>
    %10 = arith.select %7, %5, %9 : vector<2x64xi1>, vector<2x64xf32>
    %11 = arith.truncf %10 : vector<2x64xf32> to vector<2x64xbf16>
    %c0_7 = arith.constant 0 : index
    %c0_8 = arith.constant 0 : index
    %12 = vector.load %arg4[%c0_7, %c0_8] : memref<2x64xbf16, #tpu.memory_space<vmem>>, vector<2x64xbf16>
    tpu.vector_store %arg4[%c0_7, %c0_8], %11 {strides = array<i32>} : memref<2x64xbf16, #tpu.memory_space<vmem>>, vector<2x64xbf16>,
    return
  }
  func.func @transform_0(%arg0: i32) -> (i32, i32) {
    %c0_i32 = arith.constant 0 : i32
    %c0_i32_0 = arith.constant 0 : i32
    return %arg0, %c0_i32 : i32, i32
  }
  func.func @transform_1(%arg0: i32) -> (i32, i32) {
    %c0_i32 = arith.constant 0 : i32
    %c0_i32_0 = arith.constant 0 : i32
    %c0_i32_1 = arith.constant 0 : i32
    return %c0_i32, %c0_i32_0 : i32, i32
  }
  func.func @transform_2(%arg0: i32) -> (i32, i32) {
    %c0_i32 = arith.constant 0 : i32
    %c0_i32_0 = arith.constant 0 : i32
    %c0_i32_1 = arith.constant 0 : i32
    return %c0_i32, %c0_i32_0 : i32, i32
  }
  func.func @transform_3(%arg0: i32) -> (i32, i32) {
    %c0_i32 = arith.constant 0 : i32
    %c0_i32_0 = arith.constant 0 : i32
    return %arg0, %c0_i32 : i32, i32
  }
}

module attributes {stable_mosaic.version = 11 : i64} {
  func.func @_gemm_bias_act_kernel(%arg0: i32, %arg1: memref<2x576xbf16, #tpu.memory_space<vmem>>, %arg2: memref<576x128xbf16, #tpu.memory_space<vmem>>, %arg3: memref<1x128xf32, #tpu.memory_space<vmem>>, %arg4: memref<2x128xbf16, #tpu.memory_space<vmem>>) attributes {dimension_semantics = [#tpu.dimension_semantics<parallel>], iteration_bounds = array<i64: 1>, scalar_prefetch = 0 : i64, scratch_operands = 0 : i64, tpu.core_type = #tpu.core_type<tc>, window_params = [{transform_indices = @transform_0, window_bounds = array<i64: 2, 576>}, {pipeline_mode = #tpu.pipeline_mode<synchronous>, transform_indices = @transform_1, window_bounds = array<i64: 576, 128>}, {pipeline_mode = #tpu.pipeline_mode<synchronous>, transform_indices = @transform_2, window_bounds = array<i64: 1, 128>}, {transform_indices = @transform_3, window_bounds = array<i64: 2, 128>}]} {
    %c0 = arith.constant 0 : index
    %c0_0 = arith.constant 0 : index
    %0 = vector.load %arg1[%c0, %c0_0] : memref<2x576xbf16, #tpu.memory_space<vmem>>, vector<2x576xbf16>
    %c0_1 = arith.constant 0 : index
    %c0_2 = arith.constant 0 : index
    %1 = vector.load %arg2[%c0_1, %c0_2] : memref<576x128xbf16, #tpu.memory_space<vmem>>, vector<576x128xbf16>
    %cst = arith.constant dense<0.000000e+00> : vector<2x128xf32>
    %2 = tpu.matmul %0, %1, %cst {dimension_numbers = #tpu.dot_dimension_numbers<[1], [0], [0], [1], [0, 0, 1, 1], [], []>} : vector<2x576xbf16>, vector<576x128xbf16>, vector<2x128xf32> -> vector<2x128xf32>
    %c0_3 = arith.constant 0 : index
    %c0_4 = arith.constant 0 : index
    %3 = vector.load %arg3[%c0_3, %c0_4] : memref<1x128xf32, #tpu.memory_space<vmem>>, vector<1x128xf32>
    %4 = vector.broadcast %3 : vector<1x128xf32> to vector<2x128xf32>
    %5 = arith.addf %2, %4 : vector<2x128xf32>
    %cst_5 = arith.constant 0.000000e+00 : f32
    %6 = vector.broadcast %cst_5 : f32 to vector<2x128xf32>
    %7 = arith.cmpf oge, %5, %6 : vector<2x128xf32>
    %cst_6 = arith.constant 2.000000e-01 : f32
    %8 = vector.broadcast %cst_6 : f32 to vector<2x128xf32>
    %9 = arith.mulf %8, %5 : vector<2x128xf32>
    %10 = arith.select %7, %5, %9 : vector<2x128xi1>, vector<2x128xf32>
    %11 = arith.truncf %10 : vector<2x128xf32> to vector<2x128xbf16>
    %c0_7 = arith.constant 0 : index
    %c0_8 = arith.constant 0 : index
    %12 = vector.load %arg4[%c0_7, %c0_8] : memref<2x128xbf16, #tpu.memory_space<vmem>>, vector<2x128xbf16>
    tpu.vector_store %arg4[%c0_7, %c0_8], %11 {strides = array<i32>} : memref<2x128xbf16, #tpu.memory_space<vmem>>, vector<2x128xbf16>,
    return
  }
  func.func @transform_0(%arg0: i32) -> (i32, i32) {
    %c0_i32 = arith.constant 0 : i32
    %c0_i32_0 = arith.constant 0 : i32
    return %arg0, %c0_i32 : i32, i32
  }
  func.func @transform_1(%arg0: i32) -> (i32, i32) {
    %c0_i32 = arith.constant 0 : i32
    %c0_i32_0 = arith.constant 0 : i32
    %c0_i32_1 = arith.constant 0 : i32
    return %c0_i32, %c0_i32_0 : i32, i32
  }
  func.func @transform_2(%arg0: i32) -> (i32, i32) {
    %c0_i32 = arith.constant 0 : i32
    %c0_i32_0 = arith.constant 0 : i32
    %c0_i32_1 = arith.constant 0 : i32
    return %c0_i32, %c0_i32_0 : i32, i32
  }
  func.func @transform_3(%arg0: i32) -> (i32, i32) {
    %c0_i32 = arith.constant 0 : i32
    %c0_i32_0 = arith.constant 0 : i32
    return %arg0, %c0_i32 : i32, i32
  }
}

module attributes {stable_mosaic.version = 11 : i64} {
  func.func @_gemm_bias_act_kernel(%arg0: i32, %arg1: memref<8x288xbf16, #tpu.memory_space<vmem>>, %arg2: memref<288x64xbf16, #tpu.memory_space<vmem>>, %arg3: memref<1x64xf32, #tpu.memory_space<vmem>>, %arg4: memref<8x64xbf16, #tpu.memory_space<vmem>>) attributes {dimension_semantics = [#tpu.dimension_semantics<parallel>], iteration_bounds = array<i64: 1>, scalar_prefetch = 0 : i64, scratch_operands = 0 : i64, tpu.core_type = #tpu.core_type<tc>, window_params = [{transform_indices = @transform_0, window_bounds = array<i64: 8, 288>}, {pipeline_mode = #tpu.pipeline_mode<synchronous>, transform_indices = @transform_1, window_bounds = array<i64: 288, 64>}, {pipeline_mode = #tpu.pipeline_mode<synchronous>, transform_indices = @transform_2, window_bounds = array<i64: 1, 64>}, {transform_indices = @transform_3, window_bounds = array<i64: 8, 64>}]} {
    %c0 = arith.constant 0 : index
    %c0_0 = arith.constant 0 : index
    %0 = vector.load %arg1[%c0, %c0_0] : memref<8x288xbf16, #tpu.memory_space<vmem>>, vector<8x288xbf16>
    %c0_1 = arith.constant 0 : index
    %c0_2 = arith.constant 0 : index
    %1 = vector.load %arg2[%c0_1, %c0_2] : memref<288x64xbf16, #tpu.memory_space<vmem>>, vector<288x64xbf16>
    %cst = arith.constant dense<0.000000e+00> : vector<8x64xf32>
    %2 = tpu.matmul %0, %1, %cst {dimension_numbers = #tpu.dot_dimension_numbers<[1], [0], [0], [1], [0, 0, 1, 1], [], []>} : vector<8x288xbf16>, vector<288x64xbf16>, vector<8x64xf32> -> vector<8x64xf32>
    %c0_3 = arith.constant 0 : index
    %c0_4 = arith.constant 0 : index
    %3 = vector.load %arg3[%c0_3, %c0_4] : memref<1x64xf32, #tpu.memory_space<vmem>>, vector<1x64xf32>
    %4 = vector.broadcast %3 : vector<1x64xf32> to vector<8x64xf32>
    %5 = arith.addf %2, %4 : vector<8x64xf32>
    %cst_5 = arith.constant 0.000000e+00 : f32
    %6 = vector.broadcast %cst_5 : f32 to vector<8x64xf32>
    %7 = arith.cmpf oge, %5, %6 : vector<8x64xf32>
    %cst_6 = arith.constant 2.000000e-01 : f32
    %8 = vector.broadcast %cst_6 : f32 to vector<8x64xf32>
    %9 = arith.mulf %8, %5 : vector<8x64xf32>
    %10 = arith.select %7, %5, %9 : vector<8x64xi1>, vector<8x64xf32>
    %11 = arith.truncf %10 : vector<8x64xf32> to vector<8x64xbf16>
    %c0_7 = arith.constant 0 : index
    %c0_8 = arith.constant 0 : index
    %12 = vector.load %arg4[%c0_7, %c0_8] : memref<8x64xbf16, #tpu.memory_space<vmem>>, vector<8x64xbf16>
    tpu.vector_store %arg4[%c0_7, %c0_8], %11 {strides = array<i32>} : memref<8x64xbf16, #tpu.memory_space<vmem>>, vector<8x64xbf16>,
    return
  }
  func.func @transform_0(%arg0: i32) -> (i32, i32) {
    %c0_i32 = arith.constant 0 : i32
    %c0_i32_0 = arith.constant 0 : i32
    return %arg0, %c0_i32 : i32, i32
  }
  func.func @transform_1(%arg0: i32) -> (i32, i32) {
    %c0_i32 = arith.constant 0 : i32
    %c0_i32_0 = arith.constant 0 : i32
    %c0_i32_1 = arith.constant 0 : i32
    return %c0_i32, %c0_i32_0 : i32, i32
  }
  func.func @transform_2(%arg0: i32) -> (i32, i32) {
    %c0_i32 = arith.constant 0 : i32
    %c0_i32_0 = arith.constant 0 : i32
    %c0_i32_1 = arith.constant 0 : i32
    return %c0_i32, %c0_i32_0 : i32, i32
  }
  func.func @transform_3(%arg0: i32) -> (i32, i32) {
    %c0_i32 = arith.constant 0 : i32
    %c0_i32_0 = arith.constant 0 : i32
    return %arg0, %c0_i32 : i32, i32
  }
}

module attributes {stable_mosaic.version = 11 : i64} {
  func.func @_gemm_bias_act_kernel(%arg0: i32, %arg1: memref<32x144xbf16, #tpu.memory_space<vmem>>, %arg2: memref<144x32xbf16, #tpu.memory_space<vmem>>, %arg3: memref<1x32xf32, #tpu.memory_space<vmem>>, %arg4: memref<32x32xbf16, #tpu.memory_space<vmem>>) attributes {dimension_semantics = [#tpu.dimension_semantics<parallel>], iteration_bounds = array<i64: 1>, scalar_prefetch = 0 : i64, scratch_operands = 0 : i64, tpu.core_type = #tpu.core_type<tc>, window_params = [{transform_indices = @transform_0, window_bounds = array<i64: 32, 144>}, {pipeline_mode = #tpu.pipeline_mode<synchronous>, transform_indices = @transform_1, window_bounds = array<i64: 144, 32>}, {pipeline_mode = #tpu.pipeline_mode<synchronous>, transform_indices = @transform_2, window_bounds = array<i64: 1, 32>}, {transform_indices = @transform_3, window_bounds = array<i64: 32, 32>}]} {
    %c0 = arith.constant 0 : index
    %c0_0 = arith.constant 0 : index
    %0 = vector.load %arg1[%c0, %c0_0] : memref<32x144xbf16, #tpu.memory_space<vmem>>, vector<32x144xbf16>
    %c0_1 = arith.constant 0 : index
    %c0_2 = arith.constant 0 : index
    %1 = vector.load %arg2[%c0_1, %c0_2] : memref<144x32xbf16, #tpu.memory_space<vmem>>, vector<144x32xbf16>
    %cst = arith.constant dense<0.000000e+00> : vector<32x32xf32>
    %2 = tpu.matmul %0, %1, %cst {dimension_numbers = #tpu.dot_dimension_numbers<[1], [0], [0], [1], [0, 0, 1, 1], [], []>} : vector<32x144xbf16>, vector<144x32xbf16>, vector<32x32xf32> -> vector<32x32xf32>
    %c0_3 = arith.constant 0 : index
    %c0_4 = arith.constant 0 : index
    %3 = vector.load %arg3[%c0_3, %c0_4] : memref<1x32xf32, #tpu.memory_space<vmem>>, vector<1x32xf32>
    %4 = vector.broadcast %3 : vector<1x32xf32> to vector<32x32xf32>
    %5 = arith.addf %2, %4 : vector<32x32xf32>
    %cst_5 = arith.constant 0.000000e+00 : f32
    %6 = vector.broadcast %cst_5 : f32 to vector<32x32xf32>
    %7 = arith.cmpf oge, %5, %6 : vector<32x32xf32>
    %cst_6 = arith.constant 2.000000e-01 : f32
    %8 = vector.broadcast %cst_6 : f32 to vector<32x32xf32>
    %9 = arith.mulf %8, %5 : vector<32x32xf32>
    %10 = arith.select %7, %5, %9 : vector<32x32xi1>, vector<32x32xf32>
    %11 = arith.truncf %10 : vector<32x32xf32> to vector<32x32xbf16>
    %c0_7 = arith.constant 0 : index
    %c0_8 = arith.constant 0 : index
    %12 = vector.load %arg4[%c0_7, %c0_8] : memref<32x32xbf16, #tpu.memory_space<vmem>>, vector<32x32xbf16>
    tpu.vector_store %arg4[%c0_7, %c0_8], %11 {strides = array<i32>} : memref<32x32xbf16, #tpu.memory_space<vmem>>, vector<32x32xbf16>,
    return
  }
  func.func @transform_0(%arg0: i32) -> (i32, i32) {
    %c0_i32 = arith.constant 0 : i32
    %c0_i32_0 = arith.constant 0 : i32
    return %arg0, %c0_i32 : i32, i32
  }
  func.func @transform_1(%arg0: i32) -> (i32, i32) {
    %c0_i32 = arith.constant 0 : i32
    %c0_i32_0 = arith.constant 0 : i32
    %c0_i32_1 = arith.constant 0 : i32
    return %c0_i32, %c0_i32_0 : i32, i32
  }
  func.func @transform_2(%arg0: i32) -> (i32, i32) {
    %c0_i32 = arith.constant 0 : i32
    %c0_i32_0 = arith.constant 0 : i32
    %c0_i32_1 = arith.constant 0 : i32
    return %c0_i32, %c0_i32_0 : i32, i32
  }
  func.func @transform_3(%arg0: i32) -> (i32, i32) {
    %c0_i32 = arith.constant 0 : i32
    %c0_i32_0 = arith.constant 0 : i32
    return %arg0, %c0_i32 : i32, i32
  }
}

module attributes {stable_mosaic.version = 11 : i64} {
  func.func @_gemm_bias_act_kernel(%arg0: i32, %arg1: memref<128x72xbf16, #tpu.memory_space<vmem>>, %arg2: memref<72x4xbf16, #tpu.memory_space<vmem>>, %arg3: memref<1x4xf32, #tpu.memory_space<vmem>>, %arg4: memref<128x4xf32, #tpu.memory_space<vmem>>) attributes {dimension_semantics = [#tpu.dimension_semantics<parallel>], iteration_bounds = array<i64: 1>, scalar_prefetch = 0 : i64, scratch_operands = 0 : i64, tpu.core_type = #tpu.core_type<tc>, window_params = [{transform_indices = @transform_0, window_bounds = array<i64: 128, 72>}, {pipeline_mode = #tpu.pipeline_mode<synchronous>, transform_indices = @transform_1, window_bounds = array<i64: 72, 4>}, {pipeline_mode = #tpu.pipeline_mode<synchronous>, transform_indices = @transform_2, window_bounds = array<i64: 1, 4>}, {transform_indices = @transform_3, window_bounds = array<i64: 128, 4>}]} {
    %c0 = arith.constant 0 : index
    %c0_0 = arith.constant 0 : index
    %0 = vector.load %arg1[%c0, %c0_0] : memref<128x72xbf16, #tpu.memory_space<vmem>>, vector<128x72xbf16>
    %c0_1 = arith.constant 0 : index
    %c0_2 = arith.constant 0 : index
    %1 = vector.load %arg2[%c0_1, %c0_2] : memref<72x4xbf16, #tpu.memory_space<vmem>>, vector<72x4xbf16>
    %cst = arith.constant dense<0.000000e+00> : vector<128x4xf32>
    %2 = tpu.matmul %0, %1, %cst {dimension_numbers = #tpu.dot_dimension_numbers<[1], [0], [0], [1], [0, 0, 1, 1], [], []>} : vector<128x72xbf16>, vector<72x4xbf16>, vector<128x4xf32> -> vector<128x4xf32>
    %c0_3 = arith.constant 0 : index
    %c0_4 = arith.constant 0 : index
    %3 = vector.load %arg3[%c0_3, %c0_4] : memref<1x4xf32, #tpu.memory_space<vmem>>, vector<1x4xf32>
    %4 = vector.broadcast %3 : vector<1x4xf32> to vector<128x4xf32>
    %5 = arith.addf %2, %4 : vector<128x4xf32>
    %6 = arith.negf %5 : vector<128x4xf32>
    %7 = math.exp %6 : vector<128x4xf32>
    %cst_5 = arith.constant 1.000000e+00 : f32
    %8 = vector.broadcast %cst_5 : f32 to vector<128x4xf32>
    %9 = arith.addf %8, %7 : vector<128x4xf32>
    %10 = arith.divf %8, %9 : vector<128x4xf32>
    %cst_6 = arith.constant 0.000000e+00 : f32
    %cst_7 = arith.constant 1.000000e+00 : f32
    %11 = vector.broadcast %cst_6 : f32 to vector<128x4xf32>
    %12 = arith.maximumf %11, %10 : vector<128x4xf32>
    %13 = vector.broadcast %cst_7 : f32 to vector<128x4xf32>
    %14 = arith.minimumf %13, %12 : vector<128x4xf32>
    %c0_8 = arith.constant 0 : index
    %c0_9 = arith.constant 0 : index
    %15 = vector.load %arg4[%c0_8, %c0_9] : memref<128x4xf32, #tpu.memory_space<vmem>>, vector<128x4xf32>
    tpu.vector_store %arg4[%c0_8, %c0_9], %14 {strides = array<i32>} : memref<128x4xf32, #tpu.memory_space<vmem>>, vector<128x4xf32>,
    return
  }
  func.func @transform_0(%arg0: i32) -> (i32, i32) {
    %c0_i32 = arith.constant 0 : i32
    %c0_i32_0 = arith.constant 0 : i32
    return %arg0, %c0_i32 : i32, i32
  }
  func.func @transform_1(%arg0: i32) -> (i32, i32) {
    %c0_i32 = arith.constant 0 : i32
    %c0_i32_0 = arith.constant 0 : i32
    %c0_i32_1 = arith.constant 0 : i32
    return %c0_i32, %c0_i32_0 : i32, i32
  }
  func.func @transform_2(%arg0: i32) -> (i32, i32) {
    %c0_i32 = arith.constant 0 : i32
    %c0_i32_0 = arith.constant 0 : i32
    %c0_i32_1 = arith.constant 0 : i32
    return %c0_i32, %c0_i32_0 : i32, i32
  }
  func.func @transform_3(%arg0: i32) -> (i32, i32) {
    %c0_i32 = arith.constant 0 : i32
    %c0_i32_0 = arith.constant 0 : i32
    return %arg0, %c0_i32 : i32, i32
  }
}

</mosaic_0001>

<llo_original>
// kernel: masked_vae_forward.11
$region0: #{masked_vae_forward.11}
  #allocation0 [shape = 'u32[]', space=smem, size = 0x4, offset = 0x4, fixed_abs, tag = 'smem constant byte address 0x4 - core index']
  #allocation1 [shape = 'u32[72,128]{1,0:T(1,128)}', space=vmem, size = 0x9000, scoped, tag = 'internal scratch']
  %s0 = inlined_call_operand.vmem [shape: bf16[128,16], index: 0, kind: input, shape index: {}]
  %s1 = inlined_call_operand.vmem [shape: bf16[16,8], index: 1, kind: input, shape index: {}]
  %s2 = inlined_call_operand.vmem [shape: f32[1,8], index: 2, kind: input, shape index: {}]
  %s3 = inlined_call_operand.vmem [shape: bf16[128,8], index: 3, kind: output, shape index: {}]
  %s4 = sld [smem:[#allocation0]]
  $region22: #{masked_vae_forward.11} parent=0
    _
  %s6 = ssub.s32 1, %s4
  %s7 = scalar_select 0, %s6, %s4
  // Predicated region
  $region2: #{masked_vae_forward.11} parent=0 // pred_check
    _
  $region3: #{masked_vae_forward.11} parent=0 // pred_check_branch
    %9 = sbr.rel (0) target = $region5
  $region4: #{masked_vae_forward.11} parent=0 // pred_region
    _
  $region5: #{masked_vae_forward.11} parent=0 // pred_fallthru
    _
  // Predicated region
  $region6: #{masked_vae_forward.11} parent=0 // pred_check
    _
  $region7: #{masked_vae_forward.11} parent=0 // pred_check_branch
    %11 = sbr.rel (0) target = $region9
  $region8: #{masked_vae_forward.11} parent=0 // pred_region
    _
  $region9: #{masked_vae_forward.11} parent=0 // pred_fallthru
    _
  // Predicated region
  $region10: #{masked_vae_forward.11} parent=0 // pred_check
    _
  $region11: #{masked_vae_forward.11} parent=0 // pred_check_branch
    %13 = sbr.rel (0) target = $region13
  $region12: #{masked_vae_forward.11} parent=0 // pred_region
    _
  $region13: #{masked_vae_forward.11} parent=0 // pred_fallthru
    _
  %v15 = vld [vmem:[%s0] sm:$0xf]
  %v16 = vld [vmem:[%s0 + $0x4] sm:$0xf]
  %v17 = vld [vmem:[%s0 + $0x8] sm:$0xf]
  %v18 = vld [vmem:[%s0 + $0xc] sm:$0xf]
  %v19 = vld [vmem:[%s0 + $0x10] sm:$0xf]
  %v20 = vld [vmem:[%s0 + $0x14] sm:$0xf]
  %v21 = vld [vmem:[%s0 + $0x18] sm:$0xf]
  %v22 = vld [vmem:[%s0 + $0x1c] sm:$0xf]
  %v23 = vld [vmem:[%s0 + $0x20] sm:$0xf]
  %v24 = vld [vmem:[%s0 + $0x24] sm:$0xf]
  %v25 = vld [vmem:[%s0 + $0x28] sm:$0xf]
  %v26 = vld [vmem:[%s0 + $0x2c] sm:$0xf]
  %v27 = vld [vmem:[%s0 + $0x30] sm:$0xf]
  %v28 = vld [vmem:[%s0 + $0x34] sm:$0xf]
  %v29 = vld [vmem:[%s0 + $0x38] sm:$0xf]
  %v30 = vld [vmem:[%s0 + $0x3c] sm:$0xf]
  %v31 = vld [vmem:[%s1] sm:$0xf]
  %v32 = vld [vmem:[%s1 + $0x4] sm:$0xf]
  %v33 = vld [vmem:[%s2] sm:$0x1]
  %v35 = vperm.slane %v33, 0
  %v53 = vunpack.c.l.b16 %v15
  %v54 = vunpack.c.l.b16 %v16
  %v55 = vunpack.c.l.b16 %v17
  %v56 = vunpack.c.l.b16 %v18
  %v57 = vunpack.c.l.b16 %v19
  %v58 = vunpack.c.l.b16 %v20
  %v59 = vunpack.c.l.b16 %v21
  %v60 = vunpack.c.l.b16 %v22
  %v61 = vunpack.c.l.b16 %v23
  %v62 = vunpack.c.l.b16 %v24
  %v63 = vunpack.c.l.b16 %v25
  %v64 = vunpack.c.l.b16 %v26
  %v65 = vunpack.c.l.b16 %v27
  %v66 = vunpack.c.l.b16 %v28
  %v67 = vunpack.c.l.b16 %v29
  %v68 = vunpack.c.l.b16 %v30
  %v69 = vpack.c.b16 %v54, %v53
  %v70 = vpack.c.b16 %v56, %v55
  %v71 = vpack.c.b16 %v58, %v57
  %v72 = vpack.c.b16 %v60, %v59
  %v73 = vpack.c.b16 %v62, %v61
  %v74 = vpack.c.b16 %v64, %v63
  %v75 = vpack.c.b16 %v66, %v65
  %v76 = vpack.c.b16 %v68, %v67
  %v79 = vunpack.c.l.b16 %v31
  %v80 = vunpack.c.l.b16 %v32
  %v81 = vpack.c.b16 %v80, %v79
  %vm83 = vcmask 130048
  %v85 = vsel %vm83, %v69, 0
  %v88 = vsel %vm83, %v70, 0
  %v91 = vsel %vm83, %v71, 0
  %v94 = vsel %vm83, %v72, 0
  %v97 = vsel %vm83, %v73, 0
  %v100 = vsel %vm83, %v74, 0
  %v103 = vsel %vm83, %v75, 0
  %v106 = vsel %vm83, %v76, 0
  %108 = vmatpush.bf16.msra.mxu0 0
  %109 = vmatpush.bf16.msra.mxu0 0
  %110 = vmatpush.bf16.msra.mxu0 0
  %111 = vmatpush.bf16.msra.mxu0 0
  %112 = vmatpush.bf16.msra.mxu0 0
  %113 = vmatpush.bf16.msra.mxu0 0
  %114 = vmatpush.bf16.msra.mxu0 0
  %115 = vmatpush.bf16.msra.mxu0 %v81
  %116 = vmatmul.bf16.gmra.mxu0 %v85
  %v117 = vpop.f32.mrf.mxu0
  %v118 = vadd.f32 %v35, %v117
  %v119 = vpop.f32.mrf.mxu0
  %v120 = vadd.f32 %v35, %v119
  %121 = vmatmul.bf16.gmra.mxu0 %v88
  %v122 = vpop.f32.mrf.mxu0
  %v123 = vadd.f32 %v35, %v122
  %v124 = vpop.f32.mrf.mxu0
  %v125 = vadd.f32 %v35, %v124
  %126 = vmatmul.bf16.gmra.mxu0 %v91
  %v127 = vpop.f32.mrf.mxu0
  %v128 = vadd.f32 %v35, %v127
  %v129 = vpop.f32.mrf.mxu0
  %v130 = vadd.f32 %v35, %v129
  %131 = vmatmul.bf16.gmra.mxu0 %v94
  %v132 = vpop.f32.mrf.mxu0
  %v133 = vadd.f32 %v35, %v132
  %v134 = vpop.f32.mrf.mxu0
  %v135 = vadd.f32 %v35, %v134
  %136 = vmatmul.bf16.gmra.mxu0 %v97
  %v137 = vpop.f32.mrf.mxu0
  %v138 = vadd.f32 %v35, %v137
  %v139 = vpop.f32.mrf.mxu0
  %v140 = vadd.f32 %v35, %v139
  %141 = vmatmul.bf16.gmra.mxu0 %v100
  %v142 = vpop.f32.mrf.mxu0
  %v143 = vadd.f32 %v35, %v142
  %v144 = vpop.f32.mrf.mxu0
  %v145 = vadd.f32 %v35, %v144
  %146 = vmatmul.bf16.gmra.mxu0 %v103
  %v147 = vpop.f32.mrf.mxu0
  %v148 = vadd.f32 %v35, %v147
  %v149 = vpop.f32.mrf.mxu0
  %v150 = vadd.f32 %v35, %v149
  %151 = vmatmul.bf16.gmra.mxu0 %v106
  %v152 = vpop.f32.mrf.mxu0
  %v153 = vadd.f32 %v35, %v152
  %v154 = vpop.f32.mrf.mxu0
  %v155 = vadd.f32 %v35, %v154
  %156 = vdwg.mxu0
  %v157 = vmax.f32 %v118, 0.0
  %v158 = vmax.f32 %v120, 0.0
  %v159 = vmax.f32 %v123, 0.0
  %v160 = vmax.f32 %v125, 0.0
  %v161 = vmax.f32 %v128, 0.0
  %v162 = vmax.f32 %v130, 0.0
  %v163 = vmax.f32 %v133, 0.0
  %v164 = vmax.f32 %v135, 0.0
  %v165 = vmax.f32 %v138, 0.0
  %v166 = vmax.f32 %v140, 0.0
  %v167 = vmax.f32 %v143, 0.0
  %v168 = vmax.f32 %v145, 0.0
  %v169 = vmax.f32 %v148, 0.0
  %v170 = vmax.f32 %v150, 0.0
  %v171 = vmax.f32 %v153, 0.0
  %v172 = vmax.f32 %v155, 0.0
  %v173 = vpack.c.bf16 %v157, %v157
  %v174 = vpack.c.bf16 %v158, %v158
  %v175 = vpack.c.bf16 %v159, %v159
  %v176 = vpack.c.bf16 %v160, %v160
  %v177 = vpack.c.bf16 %v161, %v161
  %v178 = vpack.c.bf16 %v162, %v162
  %v179 = vpack.c.bf16 %v163, %v163
  %v180 = vpack.c.bf16 %v164, %v164
  %v181 = vpack.c.bf16 %v165, %v165
  %v182 = vpack.c.bf16 %v166, %v166
  %v183 = vpack.c.bf16 %v167, %v167
  %v184 = vpack.c.bf16 %v168, %v168
  %v185 = vpack.c.bf16 %v169, %v169
  %v186 = vpack.c.bf16 %v170, %v170
  %v187 = vpack.c.bf16 %v171, %v171
  %v188 = vpack.c.bf16 %v172, %v172
  %vm189 = vcmask 60416
  %190 = vst.msk [vmem:[%s3] sm:$0xf] %vm189, %v173
  %191 = vst.msk [vmem:[%s3 + $0x4] sm:$0xf] %vm189, %v174
  %192 = vst.msk [vmem:[%s3 + $0x8] sm:$0xf] %vm189, %v175
  %193 = vst.msk [vmem:[%s3 + $0xc] sm:$0xf] %vm189, %v176
  %194 = vst.msk [vmem:[%s3 + $0x10] sm:$0xf] %vm189, %v177
  %195 = vst.msk [vmem:[%s3 + $0x14] sm:$0xf] %vm189, %v178
  %196 = vst.msk [vmem:[%s3 + $0x18] sm:$0xf] %vm189, %v179
  %197 = vst.msk [vmem:[%s3 + $0x1c] sm:$0xf] %vm189, %v180
  %198 = vst.msk [vmem:[%s3 + $0x20] sm:$0xf] %vm189, %v181
  %199 = vst.msk [vmem:[%s3 + $0x24] sm:$0xf] %vm189, %v182
  %200 = vst.msk [vmem:[%s3 + $0x28] sm:$0xf] %vm189, %v183
  %201 = vst.msk [vmem:[%s3 + $0x2c] sm:$0xf] %vm189, %v184
  %202 = vst.msk [vmem:[%s3 + $0x30] sm:$0xf] %vm189, %v185
  %203 = vst.msk [vmem:[%s3 + $0x34] sm:$0xf] %vm189, %v186
  %204 = vst.msk [vmem:[%s3 + $0x38] sm:$0xf] %vm189, %v187
  %205 = vst.msk [vmem:[%s3 + $0x3c] sm:$0xf] %vm189, %v188
  // Predicated region
  $region14: #{masked_vae_forward.11} parent=0 // pred_check
    _
  $region15: #{masked_vae_forward.11} parent=0 // pred_check_branch
    %207 = sbr.rel (0) target = $region17
  $region16: #{masked_vae_forward.11} parent=0 // pred_region
    _
  $region17: #{masked_vae_forward.11} parent=0 // pred_fallthru
    _
  // Predicated region
  $region18: #{masked_vae_forward.11} parent=0 // pred_check
    _
  $region19: #{masked_vae_forward.11} parent=0 // pred_check_branch
    %209 = sbr.rel (0) target = $region21
  $region20: #{masked_vae_forward.11} parent=0 // pred_region
    _
  $region21: #{masked_vae_forward.11} parent=0 // pred_fallthru
    _

// kernel: masked_vae_forward.12
$region0: #{masked_vae_forward.12}
  #allocation0 [shape = 'u32[]', space=smem, size = 0x4, offset = 0x4, fixed_abs, tag = 'smem constant byte address 0x4 - core index']
  #allocation1 [shape = 'u32[72,128]{1,0:T(1,128)}', space=vmem, size = 0x9000, scoped, tag = 'internal scratch']
  %s0 = inlined_call_operand.vmem [shape: bf16[32,128], index: 0, kind: input, shape index: {}]
  %s1 = inlined_call_operand.vmem [shape: bf16[128,16], index: 1, kind: input, shape index: {}]
  %s2 = inlined_call_operand.vmem [shape: f32[1,16], index: 2, kind: input, shape index: {}]
  %s3 = inlined_call_operand.vmem [shape: bf16[32,16], index: 3, kind: output, shape index: {}]
  %s4 = sld [smem:[#allocation0]]
  $region22: #{masked_vae_forward.12} parent=0
    _
  %s6 = ssub.s32 1, %s4
  %s7 = scalar_select 0, %s6, %s4
  // Predicated region
  $region2: #{masked_vae_forward.12} parent=0 // pred_check
    _
  $region3: #{masked_vae_forward.12} parent=0 // pred_check_branch
    %9 = sbr.rel (0) target = $region5
  $region4: #{masked_vae_forward.12} parent=0 // pred_region
    _
  $region5: #{masked_vae_forward.12} parent=0 // pred_fallthru
    _
  // Predicated region
  $region6: #{masked_vae_forward.12} parent=0 // pred_check
    _
  $region7: #{masked_vae_forward.12} parent=0 // pred_check_branch
    %11 = sbr.rel (0) target = $region9
  $region8: #{masked_vae_forward.12} parent=0 // pred_region
    _
  $region9: #{masked_vae_forward.12} parent=0 // pred_fallthru
    _
  // Predicated region
  $region10: #{masked_vae_forward.12} parent=0 // pred_check
    _
  $region11: #{masked_vae_forward.12} parent=0 // pred_check_branch
    %13 = sbr.rel (0) target = $region13
  $region12: #{masked_vae_forward.12} parent=0 // pred_region
    _
  $region13: #{masked_vae_forward.12} parent=0 // pred_fallthru
    _
  %v14 = vld [vmem:[%s0] sm:$0xf]
  %v15 = vld [vmem:[%s0 + $0x4] sm:$0xf]
  %v16 = vld [vmem:[%s0 + $0x8] sm:$0xf]
  %v17 = vld [vmem:[%s0 + $0xc] sm:$0xf]
  %v18 = vld [vmem:[%s1] sm:$0xf]
  %v19 = vld [vmem:[%s1 + $0x4] sm:$0xf]
  %v20 = vld [vmem:[%s1 + $0x8] sm:$0xf]
  %v21 = vld [vmem:[%s1 + $0xc] sm:$0xf]
  %v22 = vld [vmem:[%s1 + $0x10] sm:$0xf]
  %v23 = vld [vmem:[%s1 + $0x14] sm:$0xf]
  %v24 = vld [vmem:[%s1 + $0x18] sm:$0xf]
  %v25 = vld [vmem:[%s1 + $0x1c] sm:$0xf]
  %v26 = vld [vmem:[%s1 + $0x20] sm:$0xf]
  %v27 = vld [vmem:[%s1 + $0x24] sm:$0xf]
  %v28 = vld [vmem:[%s1 + $0x28] sm:$0xf]
  %v29 = vld [vmem:[%s1 + $0x2c] sm:$0xf]
  %v30 = vld [vmem:[%s1 + $0x30] sm:$0xf]
  %v31 = vld [vmem:[%s1 + $0x34] sm:$0xf]
  %v32 = vld [vmem:[%s1 + $0x38] sm:$0xf]
  %v33 = vld [vmem:[%s1 + $0x3c] sm:$0xf]
  %v34 = vld [vmem:[%s2] sm:$0x1]
  %v36 = vperm.slane %v34, 0
  %v42 = vunpack.c.l.b16 %v14
  %v43 = vunpack.c.l.b16 %v15
  %v44 = vunpack.c.l.b16 %v16
  %v45 = vunpack.c.l.b16 %v17
  %v46 = vpack.c.b16 %v43, %v42
  %v47 = vpack.c.b16 %v45, %v44
  %v66 = vunpack.c.l.b16 %v18
  %v67 = vunpack.c.l.b16 %v19
  %v68 = vunpack.c.l.b16 %v20
  %v69 = vunpack.c.l.b16 %v21
  %v70 = vunpack.c.l.b16 %v22
  %v71 = vunpack.c.l.b16 %v23
  %v72 = vunpack.c.l.b16 %v24
  %v73 = vunpack.c.l.b16 %v25
  %v74 = vunpack.c.l.b16 %v26
  %v75 = vunpack.c.l.b16 %v27
  %v76 = vunpack.c.l.b16 %v28
  %v77 = vunpack.c.l.b16 %v29
  %v78 = vunpack.c.l.b16 %v30
  %v79 = vunpack.c.l.b16 %v31
  %v80 = vunpack.c.l.b16 %v32
  %v81 = vunpack.c.l.b16 %v33
  %v82 = vpack.c.b16 %v67, %v66
  %v83 = vpack.c.b16 %v69, %v68
  %v84 = vpack.c.b16 %v71, %v70
  %v85 = vpack.c.b16 %v73, %v72
  %v86 = vpack.c.b16 %v75, %v74
  %v87 = vpack.c.b16 %v77, %v76
  %v88 = vpack.c.b16 %v79, %v78
  %v89 = vpack.c.b16 %v81, %v80
  %98 = vmatpush.bf16.msra.mxu0 %v89
  %99 = vmatpush.bf16.msra.mxu0 %v88
  %100 = vmatpush.bf16.msra.mxu0 %v87
  %101 = vmatpush.bf16.msra.mxu0 %v86
  %102 = vmatpush.bf16.msra.mxu0 %v85
  %103 = vmatpush.bf16.msra.mxu0 %v84
  %104 = vmatpush.bf16.msra.mxu0 %v83
  %105 = vmatpush.bf16.msra.mxu0 %v82
  %106 = vmatmul.bf16.gmra.mxu0 %v46
  %v107 = vpop.f32.mrf.mxu0
  %v108 = vadd.f32 %v36, %v107
  %v109 = vpop.f32.mrf.mxu0
  %v110 = vadd.f32 %v36, %v109
  %111 = vmatmul.bf16.gmra.mxu0 %v47
  %v112 = vpop.f32.mrf.mxu0
  %v113 = vadd.f32 %v36, %v112
  %v114 = vpop.f32.mrf.mxu0
  %v115 = vadd.f32 %v36, %v114
  %116 = vdwg.mxu0
  %v117 = vmax.f32 %v108, 0.0
  %v118 = vmax.f32 %v110, 0.0
  %v119 = vmax.f32 %v113, 0.0
  %v120 = vmax.f32 %v115, 0.0
  %v121 = vpack.c.bf16 %v117, %v117
  %v122 = vpack.c.bf16 %v118, %v118
  %v123 = vpack.c.bf16 %v119, %v119
  %v124 = vpack.c.bf16 %v120, %v120
  %vm125 = vcmask 125952
  %126 = vst.msk [vmem:[%s3] sm:$0xf] %vm125, %v121
  %127 = vst.msk [vmem:[%s3 + $0x4] sm:$0xf] %vm125, %v122
  %128 = vst.msk [vmem:[%s3 + $0x8] sm:$0xf] %vm125, %v123
  %129 = vst.msk [vmem:[%s3 + $0xc] sm:$0xf] %vm125, %v124
  // Predicated region
  $region14: #{masked_vae_forward.12} parent=0 // pred_check
    _
  $region15: #{masked_vae_forward.12} parent=0 // pred_check_branch
    %131 = sbr.rel (0) target = $region17
  $region16: #{masked_vae_forward.12} parent=0 // pred_region
    _
  $region17: #{masked_vae_forward.12} parent=0 // pred_fallthru
    _
  // Predicated region
  $region18: #{masked_vae_forward.12} parent=0 // pred_check
    _
  $region19: #{masked_vae_forward.12} parent=0 // pred_check_branch
    %133 = sbr.rel (0) target = $region21
  $region20: #{masked_vae_forward.12} parent=0 // pred_region
    _
  $region21: #{masked_vae_forward.12} parent=0 // pred_fallthru
    _

// kernel: masked_vae_forward.13
$region0: #{masked_vae_forward.13}
  #allocation0 [shape = 'u32[]', space=smem, size = 0x4, offset = 0x4, fixed_abs, tag = 'smem constant byte address 0x4 - core index']
  #allocation1 [shape = 'u32[72,128]{1,0:T(1,128)}', space=vmem, size = 0x9000, scoped, tag = 'internal scratch']
  %s0 = inlined_call_operand.vmem [shape: bf16[8,256], index: 0, kind: input, shape index: {}]
  %s1 = inlined_call_operand.vmem [shape: bf16[256,32], index: 1, kind: input, shape index: {}]
  %s2 = inlined_call_operand.vmem [shape: f32[1,32], index: 2, kind: input, shape index: {}]
  %s3 = inlined_call_operand.vmem [shape: bf16[8,32], index: 3, kind: output, shape index: {}]
  %s4 = sld [smem:[#allocation0]]
  $region22: #{masked_vae_forward.13} parent=0
    _
  %s6 = ssub.s32 1, %s4
  %s7 = scalar_select 0, %s6, %s4
  // Predicated region
  $region2: #{masked_vae_forward.13} parent=0 // pred_check
    _
  $region3: #{masked_vae_forward.13} parent=0 // pred_check_branch
    %9 = sbr.rel (0) target = $region5
  $region4: #{masked_vae_forward.13} parent=0 // pred_region
    _
  $region5: #{masked_vae_forward.13} parent=0 // pred_fallthru
    _
  // Predicated region
  $region6: #{masked_vae_forward.13} parent=0 // pred_check
    _
  $region7: #{masked_vae_forward.13} parent=0 // pred_check_branch
    %11 = sbr.rel (0) target = $region9
  $region8: #{masked_vae_forward.13} parent=0 // pred_region
    _
  $region9: #{masked_vae_forward.13} parent=0 // pred_fallthru
    _
  // Predicated region
  $region10: #{masked_vae_forward.13} parent=0 // pred_check
    _
  $region11: #{masked_vae_forward.13} parent=0 // pred_check_branch
    %13 = sbr.rel (0) target = $region13
  $region12: #{masked_vae_forward.13} parent=0 // pred_region
    _
  $region13: #{masked_vae_forward.13} parent=0 // pred_fallthru
    _
  %v14 = vld [vmem:[%s0] sm:$0xff]
  %v15 = vld [vmem:[%s1] sm:$0xf]
  %v16 = vld [vmem:[%s1 + $0x4] sm:$0xf]
  %v17 = vld [vmem:[%s1 + $0x8] sm:$0xf]
  %v18 = vld [vmem:[%s1 + $0xc] sm:$0xf]
  %v19 = vld [vmem:[%s1 + $0x10] sm:$0xf]
  %v20 = vld [vmem:[%s1 + $0x14] sm:$0xf]
  %v21 = vld [vmem:[%s1 + $0x18] sm:$0xf]
  %v22 = vld [vmem:[%s1 + $0x1c] sm:$0xf]
  %v23 = vld [vmem:[%s1 + $0x20] sm:$0xf]
  %v24 = vld [vmem:[%s1 + $0x24] sm:$0xf]
  %v25 = vld [vmem:[%s1 + $0x28] sm:$0xf]
  %v26 = vld [vmem:[%s1 + $0x2c] sm:$0xf]
  %v27 = vld [vmem:[%s1 + $0x30] sm:$0xf]
  %v28 = vld [vmem:[%s1 + $0x34] sm:$0xf]
  %v29 = vld [vmem:[%s1 + $0x38] sm:$0xf]
  %v30 = vld [vmem:[%s1 + $0x3c] sm:$0xf]
  %v31 = vld [vmem:[%s1 + $0x40] sm:$0xf]
  %v32 = vld [vmem:[%s1 + $0x44] sm:$0xf]
  %v33 = vld [vmem:[%s1 + $0x48] sm:$0xf]
  %v34 = vld [vmem:[%s1 + $0x4c] sm:$0xf]
  %v35 = vld [vmem:[%s1 + $0x50] sm:$0xf]
  %v36 = vld [vmem:[%s1 + $0x54] sm:$0xf]
  %v37 = vld [vmem:[%s1 + $0x58] sm:$0xf]
  %v38 = vld [vmem:[%s1 + $0x5c] sm:$0xf]
  %v39 = vld [vmem:[%s1 + $0x60] sm:$0xf]
  %v40 = vld [vmem:[%s1 + $0x64] sm:$0xf]
  %v41 = vld [vmem:[%s1 + $0x68] sm:$0xf]
  %v42 = vld [vmem:[%s1 + $0x6c] sm:$0xf]
  %v43 = vld [vmem:[%s1 + $0x70] sm:$0xf]
  %v44 = vld [vmem:[%s1 + $0x74] sm:$0xf]
  %v45 = vld [vmem:[%s1 + $0x78] sm:$0xf]
  %v46 = vld [vmem:[%s1 + $0x7c] sm:$0xf]
  %v47 = vld [vmem:[%s2] sm:$0x1]
  %v49 = vperm.slane %v47, 0
  %v52 = vunpack.c.l.b16 %v14
  %v53 = vunpack.c.h.b16 %v14
  %v54 = vpack.c.b16 %v52, %v52
  %v55 = vpack.c.b16 %v53, %v53
  %v90 = vunpack.c.l.b16 %v15
  %v91 = vunpack.c.l.b16 %v16
  %v92 = vunpack.c.l.b16 %v17
  %v93 = vunpack.c.l.b16 %v18
  %v94 = vunpack.c.l.b16 %v19
  %v95 = vunpack.c.l.b16 %v20
  %v96 = vunpack.c.l.b16 %v21
  %v97 = vunpack.c.l.b16 %v22
  %v98 = vunpack.c.l.b16 %v23
  %v99 = vunpack.c.l.b16 %v24
  %v100 = vunpack.c.l.b16 %v25
  %v101 = vunpack.c.l.b16 %v26
  %v102 = vunpack.c.l.b16 %v27
  %v103 = vunpack.c.l.b16 %v28
  %v104 = vunpack.c.l.b16 %v29
  %v105 = vunpack.c.l.b16 %v30
  %v106 = vunpack.c.l.b16 %v31
  %v107 = vunpack.c.l.b16 %v32
  %v108 = vunpack.c.l.b16 %v33
  %v109 = vunpack.c.l.b16 %v34
  %v110 = vunpack.c.l.b16 %v35
  %v111 = vunpack.c.l.b16 %v36
  %v112 = vunpack.c.l.b16 %v37
  %v113 = vunpack.c.l.b16 %v38
  %v114 = vunpack.c.l.b16 %v39
  %v115 = vunpack.c.l.b16 %v40
  %v116 = vunpack.c.l.b16 %v41
  %v117 = vunpack.c.l.b16 %v42
  %v118 = vunpack.c.l.b16 %v43
  %v119 = vunpack.c.l.b16 %v44
  %v120 = vunpack.c.l.b16 %v45
  %v121 = vunpack.c.l.b16 %v46
  %v122 = vpack.c.b16 %v91, %v90
  %v123 = vpack.c.b16 %v93, %v92
  %v124 = vpack.c.b16 %v95, %v94
  %v125 = vpack.c.b16 %v97, %v96
  %v126 = vpack.c.b16 %v99, %v98
  %v127 = vpack.c.b16 %v101, %v100
  %v128 = vpack.c.b16 %v103, %v102
  %v129 = vpack.c.b16 %v105, %v104
  %v130 = vpack.c.b16 %v107, %v106
  %v131 = vpack.c.b16 %v109, %v108
  %v132 = vpack.c.b16 %v111, %v110
  %v133 = vpack.c.b16 %v113, %v112
  %v134 = vpack.c.b16 %v115, %v114
  %v135 = vpack.c.b16 %v117, %v116
  %v136 = vpack.c.b16 %v119, %v118
  %v137 = vpack.c.b16 %v121, %v120
  %154 = vmatpush.bf16.msra.mxu0 %v129
  %155 = vmatpush.bf16.msra.mxu0 %v128
  %156 = vmatpush.bf16.msra.mxu0 %v127
  %157 = vmatpush.bf16.msra.mxu0 %v126
  %158 = vmatpush.bf16.msra.mxu0 %v125
  %159 = vmatpush.bf16.msra.mxu0 %v124
  %160 = vmatpush.bf16.msra.mxu0 %v123
  %161 = vmatpush.bf16.msra.mxu0 %v122
  %162 = vmatmul.bf16.gmra.mxu0 %v54
  %v163 = vpop.f32.mrf.mxu0
  %v164 = vadd.f32 %v49, %v163
  %v165 = vpop.f32.mrf.mxu0
  %166 = vdwg.mxu0
  %167 = vmatpush.bf16.msra.mxu0 %v137
  %168 = vmatpush.bf16.msra.mxu0 %v136
  %169 = vmatpush.bf16.msra.mxu0 %v135
  %170 = vmatpush.bf16.msra.mxu0 %v134
  %171 = vmatpush.bf16.msra.mxu0 %v133
  %172 = vmatpush.bf16.msra.mxu0 %v132
  %173 = vmatpush.bf16.msra.mxu0 %v131
  %174 = vmatpush.bf16.msra.mxu0 %v130
  %175 = vmatmul.bf16.gmra.mxu0 %v55
  %v176 = vpop.f32.mrf.mxu0
  %v177 = vadd.f32 %v164, %v176
  %v178 = vpop.f32.mrf.mxu0
  %179 = vdwg.mxu0
  %v180 = vmax.f32 %v177, 0.0
  %v181 = vpack.c.bf16 %v180, %v180
  %vm182 = vcmask 257024
  %183 = vst.msk [vmem:[%s3] sm:$0xf] %vm182, %v181
  // Predicated region
  $region14: #{masked_vae_forward.13} parent=0 // pred_check
    _
  $region15: #{masked_vae_forward.13} parent=0 // pred_check_branch
    %185 = sbr.rel (0) target = $region17
  $region16: #{masked_vae_forward.13} parent=0 // pred_region
    _
  $region17: #{masked_vae_forward.13} parent=0 // pred_fallthru
    _
  // Predicated region
  $region18: #{masked_vae_forward.13} parent=0 // pred_check
    _
  $region19: #{masked_vae_forward.13} parent=0 // pred_check_branch
    %187 = sbr.rel (0) target = $region21
  $region20: #{masked_vae_forward.13} parent=0 // pred_region
    _
  $region21: #{masked_vae_forward.13} parent=0 // pred_fallthru
    _

// kernel: masked_vae_forward.14
$region0: #{masked_vae_forward.14}
  #allocation0 [shape = 'u32[]', space=smem, size = 0x4, offset = 0x4, fixed_abs, tag = 'smem constant byte address 0x4 - core index']
  #allocation1 [shape = 'u32[72,128]{1,0:T(1,128)}', space=vmem, size = 0x9000, scoped, tag = 'internal scratch']
  %s0 = inlined_call_operand.vmem [shape: bf16[2,512], index: 0, kind: input, shape index: {}]
  %s1 = inlined_call_operand.vmem [shape: bf16[512,64], index: 1, kind: input, shape index: {}]
  %s2 = inlined_call_operand.vmem [shape: f32[1,64], index: 2, kind: input, shape index: {}]
  %s3 = inlined_call_operand.vmem [shape: bf16[2,64], index: 3, kind: output, shape index: {}]
  %s4 = sld [smem:[#allocation0]]
  $region22: #{masked_vae_forward.14} parent=0
    _
  %s6 = ssub.s32 1, %s4
  %s7 = scalar_select 0, %s6, %s4
  // Predicated region
  $region2: #{masked_vae_forward.14} parent=0 // pred_check
    _
  $region3: #{masked_vae_forward.14} parent=0 // pred_check_branch
    %9 = sbr.rel (0) target = $region5
  $region4: #{masked_vae_forward.14} parent=0 // pred_region
    _
  $region5: #{masked_vae_forward.14} parent=0 // pred_fallthru
    _
  // Predicated region
  $region6: #{masked_vae_forward.14} parent=0 // pred_check
    _
  $region7: #{masked_vae_forward.14} parent=0 // pred_check_branch
    %11 = sbr.rel (0) target = $region9
  $region8: #{masked_vae_forward.14} parent=0 // pred_region
    _
  $region9: #{masked_vae_forward.14} parent=0 // pred_fallthru
    _
  // Predicated region
  $region10: #{masked_vae_forward.14} parent=0 // pred_check
    _
  $region11: #{masked_vae_forward.14} parent=0 // pred_check_branch
    %13 = sbr.rel (0) target = $region13
  $region12: #{masked_vae_forward.14} parent=0 // pred_region
    _
  $region13: #{masked_vae_forward.14} parent=0 // pred_fallthru
    _
  %v14 = vld [vmem:[%s0] sm:$0xf]
  %v15 = vld [vmem:[%s1] sm:$0xf]
  %v16 = vld [vmem:[%s1 + $0x4] sm:$0xf]
  %v17 = vld [vmem:[%s1 + $0x8] sm:$0xf]
  %v18 = vld [vmem:[%s1 + $0xc] sm:$0xf]
  %v19 = vld [vmem:[%s1 + $0x10] sm:$0xf]
  %v20 = vld [vmem:[%s1 + $0x14] sm:$0xf]
  %v21 = vld [vmem:[%s1 + $0x18] sm:$0xf]
  %v22 = vld [vmem:[%s1 + $0x1c] sm:$0xf]
  %v23 = vld [vmem:[%s1 + $0x20] sm:$0xf]
  %v24 = vld [vmem:[%s1 + $0x24] sm:$0xf]
  %v25 = vld [vmem:[%s1 + $0x28] sm:$0xf]
  %v26 = vld [vmem:[%s1 + $0x2c] sm:$0xf]
  %v27 = vld [vmem:[%s1 + $0x30] sm:$0xf]
  %v28 = vld [vmem:[%s1 + $0x34] sm:$0xf]
  %v29 = vld [vmem:[%s1 + $0x38] sm:$0xf]
  %v30 = vld [vmem:[%s1 + $0x3c] sm:$0xf]
  %v31 = vld [vmem:[%s1 + $0x40] sm:$0xf]
  %v32 = vld [vmem:[%s1 + $0x44] sm:$0xf]
  %v33 = vld [vmem:[%s1 + $0x48] sm:$0xf]
  %v34 = vld [vmem:[%s1 + $0x4c] sm:$0xf]
  %v35 = vld [vmem:[%s1 + $0x50] sm:$0xf]
  %v36 = vld [vmem:[%s1 + $0x54] sm:$0xf]
  %v37 = vld [vmem:[%s1 + $0x58] sm:$0xf]
  %v38 = vld [vmem:[%s1 + $0x5c] sm:$0xf]
  %v39 = vld [vmem:[%s1 + $0x60] sm:$0xf]
  %v40 = vld [vmem:[%s1 + $0x64] sm:$0xf]
  %v41 = vld [vmem:[%s1 + $0x68] sm:$0xf]
  %v42 = vld [vmem:[%s1 + $0x6c] sm:$0xf]
  %v43 = vld [vmem:[%s1 + $0x70] sm:$0xf]
  %v44 = vld [vmem:[%s1 + $0x74] sm:$0xf]
  %v45 = vld [vmem:[%s1 + $0x78] sm:$0xf]
  %v46 = vld [vmem:[%s1 + $0x7c] sm:$0xf]
  %v47 = vld [vmem:[%s1 + $0x80] sm:$0xf]
  %v48 = vld [vmem:[%s1 + $0x84] sm:$0xf]
  %v49 = vld [vmem:[%s1 + $0x88] sm:$0xf]
  %v50 = vld [vmem:[%s1 + $0x8c] sm:$0xf]
  %v51 = vld [vmem:[%s1 + $0x90] sm:$0xf]
  %v52 = vld [vmem:[%s1 + $0x94] sm:$0xf]
  %v53 = vld [vmem:[%s1 + $0x98] sm:$0xf]
  %v54 = vld [vmem:[%s1 + $0x9c] sm:$0xf]
  %v55 = vld [vmem:[%s1 + $0xa0] sm:$0xf]
  %v56 = vld [vmem:[%s1 + $0xa4] sm:$0xf]
  %v57 = vld [vmem:[%s1 + $0xa8] sm:$0xf]
  %v58 = vld [vmem:[%s1 + $0xac] sm:$0xf]
  %v59 = vld [vmem:[%s1 + $0xb0] sm:$0xf]
  %v60 = vld [vmem:[%s1 + $0xb4] sm:$0xf]
  %v61 = vld [vmem:[%s1 + $0xb8] sm:$0xf]
  %v62 = vld [vmem:[%s1 + $0xbc] sm:$0xf]
  %v63 = vld [vmem:[%s1 + $0xc0] sm:$0xf]
  %v64 = vld [vmem:[%s1 + $0xc4] sm:$0xf]
  %v65 = vld [vmem:[%s1 + $0xc8] sm:$0xf]
  %v66 = vld [vmem:[%s1 + $0xcc] sm:$0xf]
  %v67 = vld [vmem:[%s1 + $0xd0] sm:$0xf]
  %v68 = vld [vmem:[%s1 + $0xd4] sm:$0xf]
  %v69 = vld [vmem:[%s1 + $0xd8] sm:$0xf]
  %v70 = vld [vmem:[%s1 + $0xdc] sm:$0xf]
  %v71 = vld [vmem:[%s1 + $0xe0] sm:$0xf]
  %v72 = vld [vmem:[%s1 + $0xe4] sm:$0xf]
  %v73 = vld [vmem:[%s1 + $0xe8] sm:$0xf]
  %v74 = vld [vmem:[%s1 + $0xec] sm:$0xf]
  %v75 = vld [vmem:[%s1 + $0xf0] sm:$0xf]
  %v76 = vld [vmem:[%s1 + $0xf4] sm:$0xf]
  %v77 = vld [vmem:[%s1 + $0xf8] sm:$0xf]
  %v78 = vld [vmem:[%s1 + $0xfc] sm:$0xf]
  %v79 = vld [vmem:[%s2] sm:$0x1]
  %v81 = vperm.slane %v79, 0
  %84 = vst [vmem:[#allocation1] ss:$9 sm:$0xff] %v14
  %v85 = vld [vmem:[#allocation1] sm:$0xff]
  %v86 = vld [vmem:[#allocation1 + $0x9] sm:$0xff]
  %v87 = vld [vmem:[#allocation1 + $0x12] sm:$0xff]
  %v88 = vld [vmem:[#allocation1 + $0x1b] sm:$0xff]
  %v157 = vunpack.c.l.b16 %v15
  %v158 = vunpack.c.l.b16 %v16
  %v159 = vunpack.c.l.b16 %v17
  %v160 = vunpack.c.l.b16 %v18
  %v161 = vunpack.c.l.b16 %v19
  %v162 = vunpack.c.l.b16 %v20
  %v163 = vunpack.c.l.b16 %v21
  %v164 = vunpack.c.l.b16 %v22
  %v165 = vunpack.c.l.b16 %v23
  %v166 = vunpack.c.l.b16 %v24
  %v167 = vunpack.c.l.b16 %v25
  %v168 = vunpack.c.l.b16 %v26
  %v169 = vunpack.c.l.b16 %v27
  %v170 = vunpack.c.l.b16 %v28
  %v171 = vunpack.c.l.b16 %v29
  %v172 = vunpack.c.l.b16 %v30
  %v173 = vunpack.c.l.b16 %v31
  %v174 = vunpack.c.l.b16 %v32
  %v175 = vunpack.c.l.b16 %v33
  %v176 = vunpack.c.l.b16 %v34
  %v177 = vunpack.c.l.b16 %v35
  %v178 = vunpack.c.l.b16 %v36
  %v179 = vunpack.c.l.b16 %v37
  %v180 = vunpack.c.l.b16 %v38
  %v181 = vunpack.c.l.b16 %v39
  %v182 = vunpack.c.l.b16 %v40
  %v183 = vunpack.c.l.b16 %v41
  %v184 = vunpack.c.l.b16 %v42
  %v185 = vunpack.c.l.b16 %v43
  %v186 = vunpack.c.l.b16 %v44
  %v187 = vunpack.c.l.b16 %v45
  %v188 = vunpack.c.l.b16 %v46
  %v189 = vunpack.c.l.b16 %v47
  %v190 = vunpack.c.l.b16 %v48
  %v191 = vunpack.c.l.b16 %v49
  %v192 = vunpack.c.l.b16 %v50
  %v193 = vunpack.c.l.b16 %v51
  %v194 = vunpack.c.l.b16 %v52
  %v195 = vunpack.c.l.b16 %v53
  %v196 = vunpack.c.l.b16 %v54
  %v197 = vunpack.c.l.b16 %v55
  %v198 = vunpack.c.l.b16 %v56
  %v199 = vunpack.c.l.b16 %v57
  %v200 = vunpack.c.l.b16 %v58
  %v201 = vunpack.c.l.b16 %v59
  %v202 = vunpack.c.l.b16 %v60
  %v203 = vunpack.c.l.b16 %v61
  %v204 = vunpack.c.l.b16 %v62
  %v205 = vunpack.c.l.b16 %v63
  %v206 = vunpack.c.l.b16 %v64
  %v207 = vunpack.c.l.b16 %v65
  %v208 = vunpack.c.l.b16 %v66
  %v209 = vunpack.c.l.b16 %v67
  %v210 = vunpack.c.l.b16 %v68
  %v211 = vunpack.c.l.b16 %v69
  %v212 = vunpack.c.l.b16 %v70
  %v213 = vunpack.c.l.b16 %v71
  %v214 = vunpack.c.l.b16 %v72
  %v215 = vunpack.c.l.b16 %v73
  %v216 = vunpack.c.l.b16 %v74
  %v217 = vunpack.c.l.b16 %v75
  %v218 = vunpack.c.l.b16 %v76
  %v219 = vunpack.c.l.b16 %v77
  %v220 = vunpack.c.l.b16 %v78
  %v221 = vpack.c.b16 %v158, %v157
  %v222 = vpack.c.b16 %v160, %v159
  %v223 = vpack.c.b16 %v162, %v161
  %v224 = vpack.c.b16 %v164, %v163
  %v225 = vpack.c.b16 %v166, %v165
  %v226 = vpack.c.b16 %v168, %v167
  %v227 = vpack.c.b16 %v170, %v169
  %v228 = vpack.c.b16 %v172, %v171
  %v229 = vpack.c.b16 %v174, %v173
  %v230 = vpack.c.b16 %v176, %v175
  %v231 = vpack.c.b16 %v178, %v177
  %v232 = vpack.c.b16 %v180, %v179
  %v233 = vpack.c.b16 %v182, %v181
  %v234 = vpack.c.b16 %v184, %v183
  %v235 = vpack.c.b16 %v186, %v185
  %v236 = vpack.c.b16 %v188, %v187
  %v237 = vpack.c.b16 %v190, %v189
  %v238 = vpack.c.b16 %v192, %v191
  %v239 = vpack.c.b16 %v194, %v193
  %v240 = vpack.c.b16 %v196, %v195
  %v241 = vpack.c.b16 %v198, %v197
  %v242 = vpack.c.b16 %v200, %v199
  %v243 = vpack.c.b16 %v202, %v201
  %v244 = vpack.c.b16 %v204, %v203
  %v245 = vpack.c.b16 %v206, %v205
  %v246 = vpack.c.b16 %v208, %v207
  %v247 = vpack.c.b16 %v210, %v209
  %v248 = vpack.c.b16 %v212, %v211
  %v249 = vpack.c.b16 %v214, %v213
  %v250 = vpack.c.b16 %v216, %v215
  %v251 = vpack.c.b16 %v218, %v217
  %v252 = vpack.c.b16 %v220, %v219
  %285 = vmatpush.bf16.msra.mxu0 %v228
  %286 = vmatpush.bf16.msra.mxu0 %v227
  %287 = vmatpush.bf16.msra.mxu0 %v226
  %288 = vmatpush.bf16.msra.mxu0 %v225
  %289 = vmatpush.bf16.msra.mxu0 %v224
  %290 = vmatpush.bf16.msra.mxu0 %v223
  %291 = vmatpush.bf16.msra.mxu0 %v222
  %292 = vmatpush.bf16.msra.mxu0 %v221
  %293 = vmatmul.bf16.gmra.mxu0 %v85
  %v294 = vpop.f32.mrf.mxu0
  %v295 = vadd.f32 %v81, %v294
  %v296 = vpop.f32.mrf.mxu0
  %297 = vdwg.mxu0
  %298 = vmatpush.bf16.msra.mxu0 %v236
  %299 = vmatpush.bf16.msra.mxu0 %v235
  %300 = vmatpush.bf16.msra.mxu0 %v234
  %301 = vmatpush.bf16.msra.mxu0 %v233
  %302 = vmatpush.bf16.msra.mxu0 %v232
  %303 = vmatpush.bf16.msra.mxu0 %v231
  %304 = vmatpush.bf16.msra.mxu0 %v230
  %305 = vmatpush.bf16.msra.mxu0 %v229
  %306 = vmatmul.bf16.gmra.mxu0 %v86
  %v307 = vpop.f32.mrf.mxu0
  %v308 = vadd.f32 %v295, %v307
  %v309 = vpop.f32.mrf.mxu0
  %310 = vdwg.mxu0
  %311 = vmatpush.bf16.msra.mxu0 %v244
  %312 = vmatpush.bf16.msra.mxu0 %v243
  %313 = vmatpush.bf16.msra.mxu0 %v242
  %314 = vmatpush.bf16.msra.mxu0 %v241
  %315 = vmatpush.bf16.msra.mxu0 %v240
  %316 = vmatpush.bf16.msra.mxu0 %v239
  %317 = vmatpush.bf16.msra.mxu0 %v238
  %318 = vmatpush.bf16.msra.mxu0 %v237
  %319 = vmatmul.bf16.gmra.mxu0 %v87
  %v320 = vpop.f32.mrf.mxu0
  %v321 = vadd.f32 %v308, %v320
  %v322 = vpop.f32.mrf.mxu0
  %323 = vdwg.mxu0
  %324 = vmatpush.bf16.msra.mxu0 %v252
  %325 = vmatpush.bf16.msra.mxu0 %v251
  %326 = vmatpush.bf16.msra.mxu0 %v250
  %327 = vmatpush.bf16.msra.mxu0 %v249
  %328 = vmatpush.bf16.msra.mxu0 %v248
  %329 = vmatpush.bf16.msra.mxu0 %v247
  %330 = vmatpush.bf16.msra.mxu0 %v246
  %331 = vmatpush.bf16.msra.mxu0 %v245
  %332 = vmatmul.bf16.gmra.mxu0 %v88
  %v333 = vpop.f32.mrf.mxu0
  %v334 = vadd.f32 %v321, %v333
  %v335 = vpop.f32.mrf.mxu0
  %336 = vdwg.mxu0
  %v337 = vmax.f32 %v334, 0.0
  %v338 = vpack.c.bf16 %v337, %v337
  %vm339 = vcmask 516096
  %340 = vst.msk [vmem:[%s3] sm:$0x1] %vm339, %v338
  // Predicated region
  $region14: #{masked_vae_forward.14} parent=0 // pred_check
    _
  $region15: #{masked_vae_forward.14} parent=0 // pred_check_branch
    %342 = sbr.rel (0) target = $region17
  $region16: #{masked_vae_forward.14} parent=0 // pred_region
    _
  $region17: #{masked_vae_forward.14} parent=0 // pred_fallthru
    _
  // Predicated region
  $region18: #{masked_vae_forward.14} parent=0 // pred_check
    _
  $region19: #{masked_vae_forward.14} parent=0 // pred_check_branch
    %344 = sbr.rel (0) target = $region21
  $region20: #{masked_vae_forward.14} parent=0 // pred_region
    _
  $region21: #{masked_vae_forward.14} parent=0 // pred_fallthru
    _

// kernel: masked_vae_forward.15
$region0: #{masked_vae_forward.15}
  #allocation0 [shape = 'u32[]', space=smem, size = 0x4, offset = 0x4, fixed_abs, tag = 'smem constant byte address 0x4 - core index']
  #allocation1 [shape = 'u32[72,128]{1,0:T(1,128)}', space=vmem, size = 0x9000, scoped, tag = 'internal scratch']
  %s0 = inlined_call_operand.vmem [shape: bf16[2,64], index: 0, kind: input, shape index: {}]
  %s1 = inlined_call_operand.vmem [shape: bf16[64,16], index: 1, kind: input, shape index: {}]
  %s2 = inlined_call_operand.vmem [shape: f32[1,16], index: 2, kind: input, shape index: {}]
  %s3 = inlined_call_operand.vmem [shape: f32[2,16], index: 3, kind: output, shape index: {}]
  %s4 = sld [smem:[#allocation0]]
  $region22: #{masked_vae_forward.15} parent=0
    _
  %s6 = ssub.s32 1, %s4
  %s7 = scalar_select 0, %s6, %s4
  // Predicated region
  $region2: #{masked_vae_forward.15} parent=0 // pred_check
    _
  $region3: #{masked_vae_forward.15} parent=0 // pred_check_branch
    %9 = sbr.rel (0) target = $region5
  $region4: #{masked_vae_forward.15} parent=0 // pred_region
    _
  $region5: #{masked_vae_forward.15} parent=0 // pred_fallthru
    _
  // Predicated region
  $region6: #{masked_vae_forward.15} parent=0 // pred_check
    _
  $region7: #{masked_vae_forward.15} parent=0 // pred_check_branch
    %11 = sbr.rel (0) target = $region9
  $region8: #{masked_vae_forward.15} parent=0 // pred_region
    _
  $region9: #{masked_vae_forward.15} parent=0 // pred_fallthru
    _
  // Predicated region
  $region10: #{masked_vae_forward.15} parent=0 // pred_check
    _
  $region11: #{masked_vae_forward.15} parent=0 // pred_check_branch
    %13 = sbr.rel (0) target = $region13
  $region12: #{masked_vae_forward.15} parent=0 // pred_region
    _
  $region13: #{masked_vae_forward.15} parent=0 // pred_fallthru
    _
  %v15 = vld [vmem:[%s0] sm:$0x1]
  %v16 = vld [vmem:[%s1] sm:$0xf]
  %v17 = vld [vmem:[%s1 + $0x4] sm:$0xf]
  %v18 = vld [vmem:[%s1 + $0x8] sm:$0xf]
  %v19 = vld [vmem:[%s1 + $0xc] sm:$0xf]
  %v20 = vld [vmem:[%s1 + $0x10] sm:$0xf]
  %v21 = vld [vmem:[%s1 + $0x14] sm:$0xf]
  %v22 = vld [vmem:[%s1 + $0x18] sm:$0xf]
  %v23 = vld [vmem:[%s1 + $0x1c] sm:$0xf]
  %v24 = vld [vmem:[%s2] sm:$0x1]
  %v26 = vperm.slane %v24, 0
  %v36 = vunpack.c.l.b16 %v16
  %v37 = vunpack.c.l.b16 %v17
  %v38 = vunpack.c.l.b16 %v18
  %v39 = vunpack.c.l.b16 %v19
  %v40 = vunpack.c.l.b16 %v20
  %v41 = vunpack.c.l.b16 %v21
  %v42 = vunpack.c.l.b16 %v22
  %v43 = vunpack.c.l.b16 %v23
  %v44 = vpack.c.b16 %v37, %v36
  %v45 = vpack.c.b16 %v39, %v38
  %v46 = vpack.c.b16 %v41, %v40
  %v47 = vpack.c.b16 %v43, %v42
  %vm52 = vcmask 523264
  %v54 = vsel %vm52, %v15, 0
  %56 = vmatpush.bf16.msra.mxu0 0
  %57 = vmatpush.bf16.msra.mxu0 0
  %58 = vmatpush.bf16.msra.mxu0 0
  %59 = vmatpush.bf16.msra.mxu0 0
  %60 = vmatpush.bf16.msra.mxu0 %v47
  %61 = vmatpush.bf16.msra.mxu0 %v46
  %62 = vmatpush.bf16.msra.mxu0 %v45
  %63 = vmatpush.bf16.msra.mxu0 %v44
  %64 = vmatmul.bf16.gmra.mxu0 %v54
  %v65 = vpop.f32.mrf.mxu0
  %v66 = vadd.f32 %v26, %v65
  %v67 = vpop.f32.mrf.mxu0
  %68 = vdwg.mxu0
  %vm69 = vcmask 123904
  %70 = vst.msk [vmem:[%s3] sm:$0x3] %vm69, %v66
  // Predicated region
  $region14: #{masked_vae_forward.15} parent=0 // pred_check
    _
  $region15: #{masked_vae_forward.15} parent=0 // pred_check_branch
    %72 = sbr.rel (0) target = $region17
  $region16: #{masked_vae_forward.15} parent=0 // pred_region
    _
  $region17: #{masked_vae_forward.15} parent=0 // pred_fallthru
    _
  // Predicated region
  $region18: #{masked_vae_forward.15} parent=0 // pred_check
    _
  $region19: #{masked_vae_forward.15} parent=0 // pred_check_branch
    %74 = sbr.rel (0) target = $region21
  $region20: #{masked_vae_forward.15} parent=0 // pred_region
    _
  $region21: #{masked_vae_forward.15} parent=0 // pred_fallthru
    _

// kernel: masked_vae_forward.20
$region0: #{masked_vae_forward.20}
  #allocation0 [shape = 'u32[]', space=smem, size = 0x4, offset = 0x4, fixed_abs, tag = 'smem constant byte address 0x4 - core index']
  #allocation1 [shape = 'u32[72,128]{1,0:T(1,128)}', space=vmem, size = 0x9000, scoped, tag = 'internal scratch']
  %s0 = inlined_call_operand.vmem [shape: bf16[2,1,1,9,64], index: 0, kind: input, shape index: {}, may-alias: {0,4}]
  %s1 = inlined_call_operand.vmem [shape: bf16[2,8], index: 1, kind: input, shape index: {}]
  %s2 = inlined_call_operand.vmem [shape: bf16[8,64], index: 2, kind: input, shape index: {}]
  %s3 = inlined_call_operand.vmem [shape: f32[1,64], index: 3, kind: input, shape index: {}]
  %s4 = inlined_call_operand.vmem [shape: bf16[2,1,1,9,64], index: 4, kind: output, shape index: {}, may-alias: {0,4}]
  %s5 = scalar_lea.vmem %s4, 4
  %s6 = sld [smem:[#allocation0]]
  $region52: #{masked_vae_forward.20} parent=0
    _
  %s8 = ssub.s32 1, %s6
  %s9 = scalar_select 0, %s8, %s6
  $region1: #{masked_vae_forward.20} parent=0
    #allocation2 [shape = 'u8[512]{0}', space=vmem, size = 0x400, scoped, tag = 'output window, operand 0, single buffered']
    // Predicated region
    $region2: #{masked_vae_forward.20} parent=1 // pred_check
      _
    $region3: #{masked_vae_forward.20} parent=1 // pred_check_branch
      %11 = sbr.rel (0) target = $region5
    $region4: #{masked_vae_forward.20} parent=1 // pred_region
      _
    $region5: #{masked_vae_forward.20} parent=1 // pred_fallthru
      _
    // Predicated region
    $region6: #{masked_vae_forward.20} parent=1 // pred_check
      _
    $region7: #{masked_vae_forward.20} parent=1 // pred_check_branch
      %13 = sbr.rel (0) target = $region9
    $region8: #{masked_vae_forward.20} parent=1 // pred_region
      _
    $region9: #{masked_vae_forward.20} parent=1 // pred_fallthru
      _
    // Predicated region
    $region10: #{masked_vae_forward.20} parent=1 // pred_check
      _
    $region11: #{masked_vae_forward.20} parent=1 // pred_check_branch
      %15 = sbr.rel (0) target = $region13
    $region12: #{masked_vae_forward.20} parent=1 // pred_region
      _
    $region13: #{masked_vae_forward.20} parent=1 // pred_fallthru
      _
    %v17 = vld [vmem:[%s1] sm:$0x1]
    %v18 = vld [vmem:[%s2] sm:$0xf]
    %v19 = vld [vmem:[%s3] sm:$0x1]
    %v21 = vperm.slane %v19, 0
    %vm23 = vcmask 64512
    %v25 = vsel %vm23, %v17, 0
    %vm27 = vcmask 1043456
    %v29 = vsel %vm27, %v18, 0
    %31 = vmatpush.bf16.msra.mxu0 0
    %32 = vmatpush.bf16.msra.mxu0 0
    %33 = vmatpush.bf16.msra.mxu0 0
    %34 = vmatpush.bf16.msra.mxu0 0
    %35 = vmatpush.bf16.msra.mxu0 0
    %36 = vmatpush.bf16.msra.mxu0 0
    %37 = vmatpush.bf16.msra.mxu0 0
    %38 = vmatpush.bf16.msra.mxu0 %v29
    %39 = vmatmul.bf16.gmra.mxu0 %v25
    %v40 = vpop.f32.mrf.mxu0
    %v41 = vadd.f32 %v21, %v40
    %v42 = vpop.f32.mrf.mxu0
    %43 = vdwg.mxu0
    %vm44 = vcmp.ge.f32.partialorder %v41, 0.0
    %v45 = vmul.f32 %v41, 0.2
    %v46 = vsel %vm44, %v41, %v45
    %v47 = vpack.c.bf16 %v46, %v46
    %vm48 = vcmask 516096
    %49 = vst.msk [vmem:[#allocation2] sm:$0x1] %vm48, %v47
    // Predicated region
    $region14: #{masked_vae_forward.20} parent=1 // pred_check
      _
    $region15: #{masked_vae_forward.20} parent=1 // pred_check_branch
      %51 = sbr.rel (0) target = $region17
    $region16: #{masked_vae_forward.20} parent=1 // pred_region
      // Predicated region
      $region18: #{masked_vae_forward.20} parent=16 // pred_check
        _
      $region19: #{masked_vae_forward.20} parent=16 // pred_check_branch
        %53 = sbr.rel (0) target = $region21
      $region20: #{masked_vae_forward.20} parent=16 // pred_region
        // Predicated region
        $region22: #{masked_vae_forward.20} parent=20 // pred_check
          _
        $region23: #{masked_vae_forward.20} parent=20 // pred_check_branch
          %55 = sbr.rel target = $region25
        $region24: #{masked_vae_forward.20} parent=20 // pred_region
          // Predicated region
          $region37: #{masked_vae_forward.20} parent=24 // pred_check
            _
          $region38: #{masked_vae_forward.20} parent=24 // pred_check_branch
            %71 = sbr.rel (0) target = $region40
          $region39: #{masked_vae_forward.20} parent=24 // pred_region
            %s73 = ssub.s32 2, 1
            loop: start=0, step=1, limit=1
            $region41: #{masked_vae_forward.20} parent=39 // loop_pre_header
              _
            $region42: #{masked_vae_forward.20} parent=39 // loop_header
              %s75 = sphi 0, %s79
              %p76 = scmp.ge.s32.totalorder %s75, 1
              %s80 = sphi [#allocation2], [#allocation2]
              %s81 = sphi %s5, %s5
            $region43: #{masked_vae_forward.20} parent=39 // loop_header_branch
              %78 = sbr.rel (%p76) target = $region47
            $region44: #{masked_vae_forward.20} parent=39 // loop_body
              %v82 = vld [vmem:[%s80] sm:%s73]
              %83 = vst [vmem:[%s81] sm:%s73] %v82
            $region45: #{masked_vae_forward.20} parent=39 // loop_footer
              %s79 = sadd.s32 1, %s75
            $region46: #{masked_vae_forward.20} parent=39 // loop_footer_branch
              %74 = sbr.rel target = $region42
            $region47: #{masked_vae_forward.20} parent=39 // loop_exit
              _
          $region40: #{masked_vae_forward.20} parent=24 // pred_fallthru
            _
        $region25: #{masked_vae_forward.20} parent=20 // pred_fallthru
          _
        // Predicated region
        $region26: #{masked_vae_forward.20} parent=20 // pred_check
          _
        $region27: #{masked_vae_forward.20} parent=20 // pred_check_branch
          %57 = sbr.rel (0) target = $region29
        $region28: #{masked_vae_forward.20} parent=20 // pred_region
          %s59 = ssub.s32 2, 1
          loop: start=0, step=1, limit=1
          $region30: #{masked_vae_forward.20} parent=28 // loop_pre_header
            _
          $region31: #{masked_vae_forward.20} parent=28 // loop_header
            %s61 = sphi 0, %s65
            %p62 = scmp.ge.s32.totalorder %s61, 1
            %s66 = sphi [#allocation2], [#allocation2]
            %s67 = sphi %s5, %s5
          $region32: #{masked_vae_forward.20} parent=28 // loop_header_branch
            %64 = sbr.rel (%p62) target = $region36
          $region33: #{masked_vae_forward.20} parent=28 // loop_body
            %v68 = vld [vmem:[%s66] sm:%s59]
            %69 = vst [vmem:[%s67] sm:%s59] %v68
          $region34: #{masked_vae_forward.20} parent=28 // loop_footer
            %s65 = sadd.s32 1, %s61
          $region35: #{masked_vae_forward.20} parent=28 // loop_footer_branch
            %60 = sbr.rel target = $region31
          $region36: #{masked_vae_forward.20} parent=28 // loop_exit
            _
        $region29: #{masked_vae_forward.20} parent=20 // pred_fallthru
          _
      $region21: #{masked_vae_forward.20} parent=16 // pred_fallthru
        _
      %84 = vnop
    $region17: #{masked_vae_forward.20} parent=1 // pred_fallthru
      _
    // Predicated region
    $region48: #{masked_vae_forward.20} parent=1 // pred_check
      _
    $region49: #{masked_vae_forward.20} parent=1 // pred_check_branch
      %86 = sbr.rel (0) target = $region51
    $region50: #{masked_vae_forward.20} parent=1 // pred_region
      _
    $region51: #{masked_vae_forward.20} parent=1 // pred_fallthru
      _

// kernel: masked_vae_forward.16
$region0: #{masked_vae_forward.16}
  #allocation0 [shape = 'u32[]', space=smem, size = 0x4, offset = 0x4, fixed_abs, tag = 'smem constant byte address 0x4 - core index']
  #allocation1 [shape = 'u32[72,128]{1,0:T(1,128)}', space=vmem, size = 0x9000, scoped, tag = 'internal scratch']
  %s0 = inlined_call_operand.vmem [shape: bf16[2,576], index: 0, kind: input, shape index: {}]
  %s1 = inlined_call_operand.vmem [shape: bf16[576,128], index: 1, kind: input, shape index: {}]
  %s2 = inlined_call_operand.vmem [shape: f32[1,128], index: 2, kind: input, shape index: {}]
  %s3 = inlined_call_operand.vmem [shape: bf16[2,128], index: 3, kind: output, shape index: {}]
  %s4 = sld [smem:[#allocation0]]
  $region22: #{masked_vae_forward.16} parent=0
    _
  %s6 = ssub.s32 1, %s4
  %s7 = scalar_select 0, %s6, %s4
  // Predicated region
  $region2: #{masked_vae_forward.16} parent=0 // pred_check
    _
  $region3: #{masked_vae_forward.16} parent=0 // pred_check_branch
    %9 = sbr.rel (0) target = $region5
  $region4: #{masked_vae_forward.16} parent=0 // pred_region
    _
  $region5: #{masked_vae_forward.16} parent=0 // pred_fallthru
    _
  // Predicated region
  $region6: #{masked_vae_forward.16} parent=0 // pred_check
    _
  $region7: #{masked_vae_forward.16} parent=0 // pred_check_branch
    %11 = sbr.rel (0) target = $region9
  $region8: #{masked_vae_forward.16} parent=0 // pred_region
    _
  $region9: #{masked_vae_forward.16} parent=0 // pred_fallthru
    _
  // Predicated region
  $region10: #{masked_vae_forward.16} parent=0 // pred_check
    _
  $region11: #{masked_vae_forward.16} parent=0 // pred_check_branch
    %13 = sbr.rel (0) target = $region13
  $region12: #{masked_vae_forward.16} parent=0 // pred_region
    _
  $region13: #{masked_vae_forward.16} parent=0 // pred_fallthru
    _
  %v15 = vld [vmem:[%s0] sm:$0x1f]
  %v16 = vld [vmem:[%s1] sm:$0xf]
  %v17 = vld [vmem:[%s1 + $0x4] sm:$0xf]
  %v18 = vld [vmem:[%s1 + $0x8] sm:$0xf]
  %v19 = vld [vmem:[%s1 + $0xc] sm:$0xf]
  %v20 = vld [vmem:[%s1 + $0x10] sm:$0xf]
  %v21 = vld [vmem:[%s1 + $0x14] sm:$0xf]
  %v22 = vld [vmem:[%s1 + $0x18] sm:$0xf]
  %v23 = vld [vmem:[%s1 + $0x1c] sm:$0xf]
  %v24 = vld [vmem:[%s1 + $0x20] sm:$0xf]
  %v25 = vld [vmem:[%s1 + $0x24] sm:$0xf]
  %v26 = vld [vmem:[%s1 + $0x28] sm:$0xf]
  %v27 = vld [vmem:[%s1 + $0x2c] sm:$0xf]
  %v28 = vld [vmem:[%s1 + $0x30] sm:$0xf]
  %v29 = vld [vmem:[%s1 + $0x34] sm:$0xf]
  %v30 = vld [vmem:[%s1 + $0x38] sm:$0xf]
  %v31 = vld [vmem:[%s1 + $0x3c] sm:$0xf]
  %v32 = vld [vmem:[%s1 + $0x40] sm:$0xf]
  %v33 = vld [vmem:[%s1 + $0x44] sm:$0xf]
  %v34 = vld [vmem:[%s1 + $0x48] sm:$0xf]
  %v35 = vld [vmem:[%s1 + $0x4c] sm:$0xf]
  %v36 = vld [vmem:[%s1 + $0x50] sm:$0xf]
  %v37 = vld [vmem:[%s1 + $0x54] sm:$0xf]
  %v38 = vld [vmem:[%s1 + $0x58] sm:$0xf]
  %v39 = vld [vmem:[%s1 + $0x5c] sm:$0xf]
  %v40 = vld [vmem:[%s1 + $0x60] sm:$0xf]
  %v41 = vld [vmem:[%s1 + $0x64] sm:$0xf]
  %v42 = vld [vmem:[%s1 + $0x68] sm:$0xf]
  %v43 = vld [vmem:[%s1 + $0x6c] sm:$0xf]
  %v44 = vld [vmem:[%s1 + $0x70] sm:$0xf]
  %v45 = vld [vmem:[%s1 + $0x74] sm:$0xf]
  %v46 = vld [vmem:[%s1 + $0x78] sm:$0xf]
  %v47 = vld [vmem:[%s1 + $0x7c] sm:$0xf]
  %v48 = vld [vmem:[%s1 + $0x80] sm:$0xf]
  %v49 = vld [vmem:[%s1 + $0x84] sm:$0xf]
  %v50 = vld [vmem:[%s1 + $0x88] sm:$0xf]
  %v51 = vld [vmem:[%s1 + $0x8c] sm:$0xf]
  %v52 = vld [vmem:[%s1 + $0x90] sm:$0xf]
  %v53 = vld [vmem:[%s1 + $0x94] sm:$0xf]
  %v54 = vld [vmem:[%s1 + $0x98] sm:$0xf]
  %v55 = vld [vmem:[%s1 + $0x9c] sm:$0xf]
  %v56 = vld [vmem:[%s1 + $0xa0] sm:$0xf]
  %v57 = vld [vmem:[%s1 + $0xa4] sm:$0xf]
  %v58 = vld [vmem:[%s1 + $0xa8] sm:$0xf]
  %v59 = vld [vmem:[%s1 + $0xac] sm:$0xf]
  %v60 = vld [vmem:[%s1 + $0xb0] sm:$0xf]
  %v61 = vld [vmem:[%s1 + $0xb4] sm:$0xf]
  %v62 = vld [vmem:[%s1 + $0xb8] sm:$0xf]
  %v63 = vld [vmem:[%s1 + $0xbc] sm:$0xf]
  %v64 = vld [vmem:[%s1 + $0xc0] sm:$0xf]
  %v65 = vld [vmem:[%s1 + $0xc4] sm:$0xf]
  %v66 = vld [vmem:[%s1 + $0xc8] sm:$0xf]
  %v67 = vld [vmem:[%s1 + $0xcc] sm:$0xf]
  %v68 = vld [vmem:[%s1 + $0xd0] sm:$0xf]
  %v69 = vld [vmem:[%s1 + $0xd4] sm:$0xf]
  %v70 = vld [vmem:[%s1 + $0xd8] sm:$0xf]
  %v71 = vld [vmem:[%s1 + $0xdc] sm:$0xf]
  %v72 = vld [vmem:[%s1 + $0xe0] sm:$0xf]
  %v73 = vld [vmem:[%s1 + $0xe4] sm:$0xf]
  %v74 = vld [vmem:[%s1 + $0xe8] sm:$0xf]
  %v75 = vld [vmem:[%s1 + $0xec] sm:$0xf]
  %v76 = vld [vmem:[%s1 + $0xf0] sm:$0xf]
  %v77 = vld [vmem:[%s1 + $0xf4] sm:$0xf]
  %v78 = vld [vmem:[%s1 + $0xf8] sm:$0xf]
  %v79 = vld [vmem:[%s1 + $0xfc] sm:$0xf]
  %v80 = vld [vmem:[%s1 + $0x100] sm:$0xf]
  %v81 = vld [vmem:[%s1 + $0x104] sm:$0xf]
  %v82 = vld [vmem:[%s1 + $0x108] sm:$0xf]
  %v83 = vld [vmem:[%s1 + $0x10c] sm:$0xf]
  %v84 = vld [vmem:[%s1 + $0x110] sm:$0xf]
  %v85 = vld [vmem:[%s1 + $0x114] sm:$0xf]
  %v86 = vld [vmem:[%s1 + $0x118] sm:$0xf]
  %v87 = vld [vmem:[%s1 + $0x11c] sm:$0xf]
  %v88 = vld [vmem:[%s2] sm:$0x1]
  %v90 = vperm.slane %v88, 0
  %93 = vst [vmem:[#allocation1] ss:$9 sm:$0xff] %v15
  %v94 = vld [vmem:[#allocation1] sm:$0xff]
  %v95 = vld [vmem:[#allocation1 + $0x9] sm:$0xff]
  %v96 = vld [vmem:[#allocation1 + $0x12] sm:$0xff]
  %v97 = vld [vmem:[#allocation1 + $0x1b] sm:$0xff]
  %v98 = vld [vmem:[#allocation1 + $0x24] sm:$0xff]
  %v175 = vunpack.c.l.b16 %v16
  %v176 = vunpack.c.l.b16 %v17
  %v177 = vunpack.c.l.b16 %v18
  %v178 = vunpack.c.l.b16 %v19
  %v179 = vunpack.c.l.b16 %v20
  %v180 = vunpack.c.l.b16 %v21
  %v181 = vunpack.c.l.b16 %v22
  %v182 = vunpack.c.l.b16 %v23
  %v183 = vunpack.c.l.b16 %v24
  %v184 = vunpack.c.l.b16 %v25
  %v185 = vunpack.c.l.b16 %v26
  %v186 = vunpack.c.l.b16 %v27
  %v187 = vunpack.c.l.b16 %v28
  %v188 = vunpack.c.l.b16 %v29
  %v189 = vunpack.c.l.b16 %v30
  %v190 = vunpack.c.l.b16 %v31
  %v191 = vunpack.c.l.b16 %v32
  %v192 = vunpack.c.l.b16 %v33
  %v193 = vunpack.c.l.b16 %v34
  %v194 = vunpack.c.l.b16 %v35
  %v195 = vunpack.c.l.b16 %v36
  %v196 = vunpack.c.l.b16 %v37
  %v197 = vunpack.c.l.b16 %v38
  %v198 = vunpack.c.l.b16 %v39
  %v199 = vunpack.c.l.b16 %v40
  %v200 = vunpack.c.l.b16 %v41
  %v201 = vunpack.c.l.b16 %v42
  %v202 = vunpack.c.l.b16 %v43
  %v203 = vunpack.c.l.b16 %v44
  %v204 = vunpack.c.l.b16 %v45
  %v205 = vunpack.c.l.b16 %v46
  %v206 = vunpack.c.l.b16 %v47
  %v207 = vunpack.c.l.b16 %v48
  %v208 = vunpack.c.l.b16 %v49
  %v209 = vunpack.c.l.b16 %v50
  %v210 = vunpack.c.l.b16 %v51
  %v211 = vunpack.c.l.b16 %v52
  %v212 = vunpack.c.l.b16 %v53
  %v213 = vunpack.c.l.b16 %v54
  %v214 = vunpack.c.l.b16 %v55
  %v215 = vunpack.c.l.b16 %v56
  %v216 = vunpack.c.l.b16 %v57
  %v217 = vunpack.c.l.b16 %v58
  %v218 = vunpack.c.l.b16 %v59
  %v219 = vunpack.c.l.b16 %v60
  %v220 = vunpack.c.l.b16 %v61
  %v221 = vunpack.c.l.b16 %v62
  %v222 = vunpack.c.l.b16 %v63
  %v223 = vunpack.c.l.b16 %v64
  %v224 = vunpack.c.l.b16 %v65
  %v225 = vunpack.c.l.b16 %v66
  %v226 = vunpack.c.l.b16 %v67
  %v227 = vunpack.c.l.b16 %v68
  %v228 = vunpack.c.l.b16 %v69
  %v229 = vunpack.c.l.b16 %v70
  %v230 = vunpack.c.l.b16 %v71
  %v231 = vunpack.c.l.b16 %v72
  %v232 = vunpack.c.l.b16 %v73
  %v233 = vunpack.c.l.b16 %v74
  %v234 = vunpack.c.l.b16 %v75
  %v235 = vunpack.c.l.b16 %v76
  %v236 = vunpack.c.l.b16 %v77
  %v237 = vunpack.c.l.b16 %v78
  %v238 = vunpack.c.l.b16 %v79
  %v239 = vunpack.c.l.b16 %v80
  %v240 = vunpack.c.l.b16 %v81
  %v241 = vunpack.c.l.b16 %v82
  %v242 = vunpack.c.l.b16 %v83
  %v243 = vunpack.c.l.b16 %v84
  %v244 = vunpack.c.l.b16 %v85
  %v245 = vunpack.c.l.b16 %v86
  %v246 = vunpack.c.l.b16 %v87
  %v247 = vpack.c.b16 %v176, %v175
  %v248 = vpack.c.b16 %v178, %v177
  %v249 = vpack.c.b16 %v180, %v179
  %v250 = vpack.c.b16 %v182, %v181
  %v251 = vpack.c.b16 %v184, %v183
  %v252 = vpack.c.b16 %v186, %v185
  %v253 = vpack.c.b16 %v188, %v187
  %v254 = vpack.c.b16 %v190, %v189
  %v255 = vpack.c.b16 %v192, %v191
  %v256 = vpack.c.b16 %v194, %v193
  %v257 = vpack.c.b16 %v196, %v195
  %v258 = vpack.c.b16 %v198, %v197
  %v259 = vpack.c.b16 %v200, %v199
  %v260 = vpack.c.b16 %v202, %v201
  %v261 = vpack.c.b16 %v204, %v203
  %v262 = vpack.c.b16 %v206, %v205
  %v263 = vpack.c.b16 %v208, %v207
  %v264 = vpack.c.b16 %v210, %v209
  %v265 = vpack.c.b16 %v212, %v211
  %v266 = vpack.c.b16 %v214, %v213
  %v267 = vpack.c.b16 %v216, %v215
  %v268 = vpack.c.b16 %v218, %v217
  %v269 = vpack.c.b16 %v220, %v219
  %v270 = vpack.c.b16 %v222, %v221
  %v271 = vpack.c.b16 %v224, %v223
  %v272 = vpack.c.b16 %v226, %v225
  %v273 = vpack.c.b16 %v228, %v227
  %v274 = vpack.c.b16 %v230, %v229
  %v275 = vpack.c.b16 %v232, %v231
  %v276 = vpack.c.b16 %v234, %v233
  %v277 = vpack.c.b16 %v236, %v235
  %v278 = vpack.c.b16 %v238, %v237
  %v279 = vpack.c.b16 %v240, %v239
  %v280 = vpack.c.b16 %v242, %v241
  %v281 = vpack.c.b16 %v244, %v243
  %v282 = vpack.c.b16 %v246, %v245
  %vm319 = vcmask 523264
  %v320 = vsel %vm319, %v98, 0
  %322 = vmatpush.bf16.msra.mxu0 %v254
  %323 = vmatpush.bf16.msra.mxu0 %v253
  %324 = vmatpush.bf16.msra.mxu0 %v252
  %325 = vmatpush.bf16.msra.mxu0 %v251
  %326 = vmatpush.bf16.msra.mxu0 %v250
  %327 = vmatpush.bf16.msra.mxu0 %v249
  %328 = vmatpush.bf16.msra.mxu0 %v248
  %329 = vmatpush.bf16.msra.mxu0 %v247
  %330 = vmatmul.bf16.gmra.mxu0 %v94
  %v331 = vpop.f32.mrf.mxu0
  %v332 = vadd.f32 %v90, %v331
  %v333 = vpop.f32.mrf.mxu0
  %334 = vdwg.mxu0
  %335 = vmatpush.bf16.msra.mxu0 %v262
  %336 = vmatpush.bf16.msra.mxu0 %v261
  %337 = vmatpush.bf16.msra.mxu0 %v260
  %338 = vmatpush.bf16.msra.mxu0 %v259
  %339 = vmatpush.bf16.msra.mxu0 %v258
  %340 = vmatpush.bf16.msra.mxu0 %v257
  %341 = vmatpush.bf16.msra.mxu0 %v256
  %342 = vmatpush.bf16.msra.mxu0 %v255
  %343 = vmatmul.bf16.gmra.mxu0 %v95
  %v344 = vpop.f32.mrf.mxu0
  %v345 = vadd.f32 %v332, %v344
  %v346 = vpop.f32.mrf.mxu0
  %347 = vdwg.mxu0
  %348 = vmatpush.bf16.msra.mxu0 %v270
  %349 = vmatpush.bf16.msra.mxu0 %v269
  %350 = vmatpush.bf16.msra.mxu0 %v268
  %351 = vmatpush.bf16.msra.mxu0 %v267
  %352 = vmatpush.bf16.msra.mxu0 %v266
  %353 = vmatpush.bf16.msra.mxu0 %v265
  %354 = vmatpush.bf16.msra.mxu0 %v264
  %355 = vmatpush.bf16.msra.mxu0 %v263
  %356 = vmatmul.bf16.gmra.mxu0 %v96
  %v357 = vpop.f32.mrf.mxu0
  %v358 = vadd.f32 %v345, %v357
  %v359 = vpop.f32.mrf.mxu0
  %360 = vdwg.mxu0
  %361 = vmatpush.bf16.msra.mxu0 %v278
  %362 = vmatpush.bf16.msra.mxu0 %v277
  %363 = vmatpush.bf16.msra.mxu0 %v276
  %364 = vmatpush.bf16.msra.mxu0 %v275
  %365 = vmatpush.bf16.msra.mxu0 %v274
  %366 = vmatpush.bf16.msra.mxu0 %v273
  %367 = vmatpush.bf16.msra.mxu0 %v272
  %368 = vmatpush.bf16.msra.mxu0 %v271
  %369 = vmatmul.bf16.gmra.mxu0 %v97
  %v370 = vpop.f32.mrf.mxu0
  %v371 = vadd.f32 %v358, %v370
  %v372 = vpop.f32.mrf.mxu0
  %373 = vdwg.mxu0
  %374 = vmatpush.bf16.msra.mxu0 0
  %375 = vmatpush.bf16.msra.mxu0 0
  %376 = vmatpush.bf16.msra.mxu0 0
  %377 = vmatpush.bf16.msra.mxu0 0
  %378 = vmatpush.bf16.msra.mxu0 %v282
  %379 = vmatpush.bf16.msra.mxu0 %v281
  %380 = vmatpush.bf16.msra.mxu0 %v280
  %381 = vmatpush.bf16.msra.mxu0 %v279
  %382 = vmatmul.bf16.gmra.mxu0 %v320
  %v383 = vpop.f32.mrf.mxu0
  %v384 = vadd.f32 %v371, %v383
  %v385 = vpop.f32.mrf.mxu0
  %386 = vdwg.mxu0
  %vm387 = vcmp.ge.f32.partialorder %v384, 0.0
  %v388 = vmul.f32 %v384, 0.2
  %v389 = vsel %vm387, %v384, %v388
  %v390 = vpack.c.bf16 %v389, %v389
  %391 = vst [vmem:[%s3] sm:$0x1] %v390
  // Predicated region
  $region14: #{masked_vae_forward.16} parent=0 // pred_check
    _
  $region15: #{masked_vae_forward.16} parent=0 // pred_check_branch
    %393 = sbr.rel (0) target = $region17
  $region16: #{masked_vae_forward.16} parent=0 // pred_region
    _
  $region17: #{masked_vae_forward.16} parent=0 // pred_fallthru
    _
  // Predicated region
  $region18: #{masked_vae_forward.16} parent=0 // pred_check
    _
  $region19: #{masked_vae_forward.16} parent=0 // pred_check_branch
    %395 = sbr.rel (0) target = $region21
  $region20: #{masked_vae_forward.16} parent=0 // pred_region
    _
  $region21: #{masked_vae_forward.16} parent=0 // pred_fallthru
    _

// kernel: masked_vae_forward.17
$region0: #{masked_vae_forward.17}
  #allocation0 [shape = 'u32[]', space=smem, size = 0x4, offset = 0x4, fixed_abs, tag = 'smem constant byte address 0x4 - core index']
  #allocation1 [shape = 'u32[72,128]{1,0:T(1,128)}', space=vmem, size = 0x9000, scoped, tag = 'internal scratch']
  %s0 = inlined_call_operand.vmem [shape: bf16[8,288], index: 0, kind: input, shape index: {}]
  %s1 = inlined_call_operand.vmem [shape: bf16[288,64], index: 1, kind: input, shape index: {}]
  %s2 = inlined_call_operand.vmem [shape: f32[1,64], index: 2, kind: input, shape index: {}]
  %s3 = inlined_call_operand.vmem [shape: bf16[8,64], index: 3, kind: output, shape index: {}]
  %s4 = sld [smem:[#allocation0]]
  $region22: #{masked_vae_forward.17} parent=0
    _
  %s6 = ssub.s32 1, %s4
  %s7 = scalar_select 0, %s6, %s4
  // Predicated region
  $region2: #{masked_vae_forward.17} parent=0 // pred_check
    _
  $region3: #{masked_vae_forward.17} parent=0 // pred_check_branch
    %9 = sbr.rel (0) target = $region5
  $region4: #{masked_vae_forward.17} parent=0 // pred_region
    _
  $region5: #{masked_vae_forward.17} parent=0 // pred_fallthru
    _
  // Predicated region
  $region6: #{masked_vae_forward.17} parent=0 // pred_check
    _
  $region7: #{masked_vae_forward.17} parent=0 // pred_check_branch
    %11 = sbr.rel (0) target = $region9
  $region8: #{masked_vae_forward.17} parent=0 // pred_region
    _
  $region9: #{masked_vae_forward.17} parent=0 // pred_fallthru
    _
  // Predicated region
  $region10: #{masked_vae_forward.17} parent=0 // pred_check
    _
  $region11: #{masked_vae_forward.17} parent=0 // pred_check_branch
    %13 = sbr.rel (0) target = $region13
  $region12: #{masked_vae_forward.17} parent=0 // pred_region
    _
  $region13: #{masked_vae_forward.17} parent=0 // pred_fallthru
    _
  %v15 = vld [vmem:[%s0] sm:$0xff]
  %v16 = vld [vmem:[%s0 + $0x8] sm:$0xf]
  %v17 = vld [vmem:[%s1] sm:$0xf]
  %v18 = vld [vmem:[%s1 + $0x4] sm:$0xf]
  %v19 = vld [vmem:[%s1 + $0x8] sm:$0xf]
  %v20 = vld [vmem:[%s1 + $0xc] sm:$0xf]
  %v21 = vld [vmem:[%s1 + $0x10] sm:$0xf]
  %v22 = vld [vmem:[%s1 + $0x14] sm:$0xf]
  %v23 = vld [vmem:[%s1 + $0x18] sm:$0xf]
  %v24 = vld [vmem:[%s1 + $0x1c] sm:$0xf]
  %v25 = vld [vmem:[%s1 + $0x20] sm:$0xf]
  %v26 = vld [vmem:[%s1 + $0x24] sm:$0xf]
  %v27 = vld [vmem:[%s1 + $0x28] sm:$0xf]
  %v28 = vld [vmem:[%s1 + $0x2c] sm:$0xf]
  %v29 = vld [vmem:[%s1 + $0x30] sm:$0xf]
  %v30 = vld [vmem:[%s1 + $0x34] sm:$0xf]
  %v31 = vld [vmem:[%s1 + $0x38] sm:$0xf]
  %v32 = vld [vmem:[%s1 + $0x3c] sm:$0xf]
  %v33 = vld [vmem:[%s1 + $0x40] sm:$0xf]
  %v34 = vld [vmem:[%s1 + $0x44] sm:$0xf]
  %v35 = vld [vmem:[%s1 + $0x48] sm:$0xf]
  %v36 = vld [vmem:[%s1 + $0x4c] sm:$0xf]
  %v37 = vld [vmem:[%s1 + $0x50] sm:$0xf]
  %v38 = vld [vmem:[%s1 + $0x54] sm:$0xf]
  %v39 = vld [vmem:[%s1 + $0x58] sm:$0xf]
  %v40 = vld [vmem:[%s1 + $0x5c] sm:$0xf]
  %v41 = vld [vmem:[%s1 + $0x60] sm:$0xf]
  %v42 = vld [vmem:[%s1 + $0x64] sm:$0xf]
  %v43 = vld [vmem:[%s1 + $0x68] sm:$0xf]
  %v44 = vld [vmem:[%s1 + $0x6c] sm:$0xf]
  %v45 = vld [vmem:[%s1 + $0x70] sm:$0xf]
  %v46 = vld [vmem:[%s1 + $0x74] sm:$0xf]
  %v47 = vld [vmem:[%s1 + $0x78] sm:$0xf]
  %v48 = vld [vmem:[%s1 + $0x7c] sm:$0xf]
  %v49 = vld [vmem:[%s1 + $0x80] sm:$0xf]
  %v50 = vld [vmem:[%s1 + $0x84] sm:$0xf]
  %v51 = vld [vmem:[%s1 + $0x88] sm:$0xf]
  %v52 = vld [vmem:[%s1 + $0x8c] sm:$0xf]
  %v53 = vld [vmem:[%s2] sm:$0x1]
  %v55 = vperm.slane %v53, 0
  %v59 = vunpack.c.l.b16 %v15
  %v60 = vunpack.c.h.b16 %v15
  %v61 = vunpack.c.l.b16 %v16
  %v62 = vpack.c.b16 %v59, %v59
  %v63 = vpack.c.b16 %v60, %v60
  %v64 = vpack.c.b16 %v61, %v61
  %v103 = vunpack.c.l.b16 %v17
  %v104 = vunpack.c.l.b16 %v18
  %v105 = vunpack.c.l.b16 %v19
  %v106 = vunpack.c.l.b16 %v20
  %v107 = vunpack.c.l.b16 %v21
  %v108 = vunpack.c.l.b16 %v22
  %v109 = vunpack.c.l.b16 %v23
  %v110 = vunpack.c.l.b16 %v24
  %v111 = vunpack.c.l.b16 %v25
  %v112 = vunpack.c.l.b16 %v26
  %v113 = vunpack.c.l.b16 %v27
  %v114 = vunpack.c.l.b16 %v28
  %v115 = vunpack.c.l.b16 %v29
  %v116 = vunpack.c.l.b16 %v30
  %v117 = vunpack.c.l.b16 %v31
  %v118 = vunpack.c.l.b16 %v32
  %v119 = vunpack.c.l.b16 %v33
  %v120 = vunpack.c.l.b16 %v34
  %v121 = vunpack.c.l.b16 %v35
  %v122 = vunpack.c.l.b16 %v36
  %v123 = vunpack.c.l.b16 %v37
  %v124 = vunpack.c.l.b16 %v38
  %v125 = vunpack.c.l.b16 %v39
  %v126 = vunpack.c.l.b16 %v40
  %v127 = vunpack.c.l.b16 %v41
  %v128 = vunpack.c.l.b16 %v42
  %v129 = vunpack.c.l.b16 %v43
  %v130 = vunpack.c.l.b16 %v44
  %v131 = vunpack.c.l.b16 %v45
  %v132 = vunpack.c.l.b16 %v46
  %v133 = vunpack.c.l.b16 %v47
  %v134 = vunpack.c.l.b16 %v48
  %v135 = vunpack.c.l.b16 %v49
  %v136 = vunpack.c.l.b16 %v50
  %v137 = vunpack.c.l.b16 %v51
  %v138 = vunpack.c.l.b16 %v52
  %v139 = vpack.c.b16 %v104, %v103
  %v140 = vpack.c.b16 %v106, %v105
  %v141 = vpack.c.b16 %v108, %v107
  %v142 = vpack.c.b16 %v110, %v109
  %v143 = vpack.c.b16 %v112, %v111
  %v144 = vpack.c.b16 %v114, %v113
  %v145 = vpack.c.b16 %v116, %v115
  %v146 = vpack.c.b16 %v118, %v117
  %v147 = vpack.c.b16 %v120, %v119
  %v148 = vpack.c.b16 %v122, %v121
  %v149 = vpack.c.b16 %v124, %v123
  %v150 = vpack.c.b16 %v126, %v125
  %v151 = vpack.c.b16 %v128, %v127
  %v152 = vpack.c.b16 %v130, %v129
  %v153 = vpack.c.b16 %v132, %v131
  %v154 = vpack.c.b16 %v134, %v133
  %v155 = vpack.c.b16 %v136, %v135
  %v156 = vpack.c.b16 %v138, %v137
  %vm175 = vcmask 261120
  %v177 = vsel %vm175, %v64, 0
  %179 = vmatpush.bf16.msra.mxu0 %v146
  %180 = vmatpush.bf16.msra.mxu0 %v145
  %181 = vmatpush.bf16.msra.mxu0 %v144
  %182 = vmatpush.bf16.msra.mxu0 %v143
  %183 = vmatpush.bf16.msra.mxu0 %v142
  %184 = vmatpush.bf16.msra.mxu0 %v141
  %185 = vmatpush.bf16.msra.mxu0 %v140
  %186 = vmatpush.bf16.msra.mxu0 %v139
  %187 = vmatmul.bf16.gmra.mxu0 %v62
  %v188 = vpop.f32.mrf.mxu0
  %v189 = vadd.f32 %v55, %v188
  %v190 = vpop.f32.mrf.mxu0
  %191 = vdwg.mxu0
  %192 = vmatpush.bf16.msra.mxu0 %v154
  %193 = vmatpush.bf16.msra.mxu0 %v153
  %194 = vmatpush.bf16.msra.mxu0 %v152
  %195 = vmatpush.bf16.msra.mxu0 %v151
  %196 = vmatpush.bf16.msra.mxu0 %v150
  %197 = vmatpush.bf16.msra.mxu0 %v149
  %198 = vmatpush.bf16.msra.mxu0 %v148
  %199 = vmatpush.bf16.msra.mxu0 %v147
  %200 = vmatmul.bf16.gmra.mxu0 %v63
  %v201 = vpop.f32.mrf.mxu0
  %v202 = vadd.f32 %v189, %v201
  %v203 = vpop.f32.mrf.mxu0
  %204 = vdwg.mxu0
  %205 = vmatpush.bf16.msra.mxu0 0
  %206 = vmatpush.bf16.msra.mxu0 0
  %207 = vmatpush.bf16.msra.mxu0 0
  %208 = vmatpush.bf16.msra.mxu0 0
  %209 = vmatpush.bf16.msra.mxu0 0
  %210 = vmatpush.bf16.msra.mxu0 0
  %211 = vmatpush.bf16.msra.mxu0 %v156
  %212 = vmatpush.bf16.msra.mxu0 %v155
  %213 = vmatmul.bf16.gmra.mxu0 %v177
  %v214 = vpop.f32.mrf.mxu0
  %v215 = vadd.f32 %v202, %v214
  %v216 = vpop.f32.mrf.mxu0
  %217 = vdwg.mxu0
  %vm218 = vcmp.ge.f32.partialorder %v215, 0.0
  %v219 = vmul.f32 %v215, 0.2
  %v220 = vsel %vm218, %v215, %v219
  %v221 = vpack.c.bf16 %v220, %v220
  %vm222 = vcmask 519168
  %223 = vst.msk [vmem:[%s3] sm:$0xf] %vm222, %v221
  // Predicated region
  $region14: #{masked_vae_forward.17} parent=0 // pred_check
    _
  $region15: #{masked_vae_forward.17} parent=0 // pred_check_branch
    %225 = sbr.rel (0) target = $region17
  $region16: #{masked_vae_forward.17} parent=0 // pred_region
    _
  $region17: #{masked_vae_forward.17} parent=0 // pred_fallthru
    _
  // Predicated region
  $region18: #{masked_vae_forward.17} parent=0 // pred_check
    _
  $region19: #{masked_vae_forward.17} parent=0 // pred_check_branch
    %227 = sbr.rel (0) target = $region21
  $region20: #{masked_vae_forward.17} parent=0 // pred_region
    _
  $region21: #{masked_vae_forward.17} parent=0 // pred_fallthru
    _

// kernel: masked_vae_forward.18
$region0: #{masked_vae_forward.18}
  #allocation0 [shape = 'u32[]', space=smem, size = 0x4, offset = 0x4, fixed_abs, tag = 'smem constant byte address 0x4 - core index']
  #allocation1 [shape = 'u32[72,128]{1,0:T(1,128)}', space=vmem, size = 0x9000, scoped, tag = 'internal scratch']
  %s0 = inlined_call_operand.vmem [shape: bf16[32,144], index: 0, kind: input, shape index: {}]
  %s1 = inlined_call_operand.vmem [shape: bf16[144,32], index: 1, kind: input, shape index: {}]
  %s2 = inlined_call_operand.vmem [shape: f32[1,32], index: 2, kind: input, shape index: {}]
  %s3 = inlined_call_operand.vmem [shape: bf16[32,32], index: 3, kind: output, shape index: {}]
  %s4 = sld [smem:[#allocation0]]
  $region22: #{masked_vae_forward.18} parent=0
    _
  %s6 = ssub.s32 1, %s4
  %s7 = scalar_select 0, %s6, %s4
  // Predicated region
  $region2: #{masked_vae_forward.18} parent=0 // pred_check
    _
  $region3: #{masked_vae_forward.18} parent=0 // pred_check_branch
    %9 = sbr.rel (0) target = $region5
  $region4: #{masked_vae_forward.18} parent=0 // pred_region
    _
  $region5: #{masked_vae_forward.18} parent=0 // pred_fallthru
    _
  // Predicated region
  $region6: #{masked_vae_forward.18} parent=0 // pred_check
    _
  $region7: #{masked_vae_forward.18} parent=0 // pred_check_branch
    %11 = sbr.rel (0) target = $region9
  $region8: #{masked_vae_forward.18} parent=0 // pred_region
    _
  $region9: #{masked_vae_forward.18} parent=0 // pred_fallthru
    _
  // Predicated region
  $region10: #{masked_vae_forward.18} parent=0 // pred_check
    _
  $region11: #{masked_vae_forward.18} parent=0 // pred_check_branch
    %13 = sbr.rel (0) target = $region13
  $region12: #{masked_vae_forward.18} parent=0 // pred_region
    _
  $region13: #{masked_vae_forward.18} parent=0 // pred_fallthru
    _
  %v15 = vld [vmem:[%s0] sm:$0xff]
  %v16 = vld [vmem:[%s0 + $0x8] sm:$0xff]
  %v17 = vld [vmem:[%s0 + $0x10] sm:$0xff]
  %v18 = vld [vmem:[%s0 + $0x18] sm:$0xff]
  %v19 = vld [vmem:[%s1] sm:$0xf]
  %v20 = vld [vmem:[%s1 + $0x4] sm:$0xf]
  %v21 = vld [vmem:[%s1 + $0x8] sm:$0xf]
  %v22 = vld [vmem:[%s1 + $0xc] sm:$0xf]
  %v23 = vld [vmem:[%s1 + $0x10] sm:$0xf]
  %v24 = vld [vmem:[%s1 + $0x14] sm:$0xf]
  %v25 = vld [vmem:[%s1 + $0x18] sm:$0xf]
  %v26 = vld [vmem:[%s1 + $0x1c] sm:$0xf]
  %v27 = vld [vmem:[%s1 + $0x20] sm:$0xf]
  %v28 = vld [vmem:[%s1 + $0x24] sm:$0xf]
  %v29 = vld [vmem:[%s1 + $0x28] sm:$0xf]
  %v30 = vld [vmem:[%s1 + $0x2c] sm:$0xf]
  %v31 = vld [vmem:[%s1 + $0x30] sm:$0xf]
  %v32 = vld [vmem:[%s1 + $0x34] sm:$0xf]
  %v33 = vld [vmem:[%s1 + $0x38] sm:$0xf]
  %v34 = vld [vmem:[%s1 + $0x3c] sm:$0xf]
  %v35 = vld [vmem:[%s1 + $0x40] sm:$0xf]
  %v36 = vld [vmem:[%s1 + $0x44] sm:$0xf]
  %v37 = vld [vmem:[%s2] sm:$0x1]
  %v39 = vperm.slane %v37, 0
  %v45 = vunpack.c.l.b16 %v15
  %v46 = vunpack.c.h.b16 %v15
  %v47 = vunpack.c.l.b16 %v16
  %v48 = vunpack.c.h.b16 %v16
  %v49 = vunpack.c.l.b16 %v17
  %v50 = vunpack.c.h.b16 %v17
  %v51 = vunpack.c.l.b16 %v18
  %v52 = vunpack.c.h.b16 %v18
  %v53 = vpack.c.b16 %v47, %v45
  %v54 = vpack.c.b16 %v48, %v46
  %v55 = vpack.c.b16 %v51, %v49
  %v56 = vpack.c.b16 %v52, %v50
  %v77 = vunpack.c.l.b16 %v19
  %v78 = vunpack.c.l.b16 %v20
  %v79 = vunpack.c.l.b16 %v21
  %v80 = vunpack.c.l.b16 %v22
  %v81 = vunpack.c.l.b16 %v23
  %v82 = vunpack.c.l.b16 %v24
  %v83 = vunpack.c.l.b16 %v25
  %v84 = vunpack.c.l.b16 %v26
  %v85 = vunpack.c.l.b16 %v27
  %v86 = vunpack.c.l.b16 %v28
  %v87 = vunpack.c.l.b16 %v29
  %v88 = vunpack.c.l.b16 %v30
  %v89 = vunpack.c.l.b16 %v31
  %v90 = vunpack.c.l.b16 %v32
  %v91 = vunpack.c.l.b16 %v33
  %v92 = vunpack.c.l.b16 %v34
  %v93 = vunpack.c.l.b16 %v35
  %v94 = vunpack.c.l.b16 %v36
  %v95 = vpack.c.b16 %v78, %v77
  %v96 = vpack.c.b16 %v80, %v79
  %v97 = vpack.c.b16 %v82, %v81
  %v98 = vpack.c.b16 %v84, %v83
  %v99 = vpack.c.b16 %v86, %v85
  %v100 = vpack.c.b16 %v88, %v87
  %v101 = vpack.c.b16 %v90, %v89
  %v102 = vpack.c.b16 %v92, %v91
  %v103 = vpack.c.b16 %v94, %v93
  %vm113 = vcmask 130048
  %v115 = vsel %vm113, %v54, 0
  %v118 = vsel %vm113, %v56, 0
  %120 = vmatpush.bf16.msra.mxu0 %v102
  %121 = vmatpush.bf16.msra.mxu0 %v101
  %122 = vmatpush.bf16.msra.mxu0 %v100
  %123 = vmatpush.bf16.msra.mxu0 %v99
  %124 = vmatpush.bf16.msra.mxu0 %v98
  %125 = vmatpush.bf16.msra.mxu0 %v97
  %126 = vmatpush.bf16.msra.mxu0 %v96
  %127 = vmatpush.bf16.msra.mxu0 %v95
  %128 = vmatmul.bf16.gmra.mxu0 %v53
  %v129 = vpop.f32.mrf.mxu0
  %v130 = vadd.f32 %v39, %v129
  %v131 = vpop.f32.mrf.mxu0
  %v132 = vadd.f32 %v39, %v131
  %133 = vmatmul.bf16.gmra.mxu0 %v55
  %v134 = vpop.f32.mrf.mxu0
  %v135 = vadd.f32 %v39, %v134
  %v136 = vpop.f32.mrf.mxu0
  %v137 = vadd.f32 %v39, %v136
  %138 = vdwg.mxu0
  %139 = vmatpush.bf16.msra.mxu0 0
  %140 = vmatpush.bf16.msra.mxu0 0
  %141 = vmatpush.bf16.msra.mxu0 0
  %142 = vmatpush.bf16.msra.mxu0 0
  %143 = vmatpush.bf16.msra.mxu0 0
  %144 = vmatpush.bf16.msra.mxu0 0
  %145 = vmatpush.bf16.msra.mxu0 0
  %146 = vmatpush.bf16.msra.mxu0 %v103
  %147 = vmatmul.bf16.gmra.mxu0 %v115
  %v148 = vpop.f32.mrf.mxu0
  %v149 = vadd.f32 %v130, %v148
  %v150 = vpop.f32.mrf.mxu0
  %v151 = vadd.f32 %v132, %v150
  %152 = vmatmul.bf16.gmra.mxu0 %v118
  %v153 = vpop.f32.mrf.mxu0
  %v154 = vadd.f32 %v135, %v153
  %v155 = vpop.f32.mrf.mxu0
  %v156 = vadd.f32 %v137, %v155
  %157 = vdwg.mxu0
  %vm158 = vcmp.ge.f32.partialorder %v149, 0.0
  %vm159 = vcmp.ge.f32.partialorder %v151, 0.0
  %vm160 = vcmp.ge.f32.partialorder %v154, 0.0
  %vm161 = vcmp.ge.f32.partialorder %v156, 0.0
  %v162 = vmul.f32 %v149, 0.2
  %v163 = vmul.f32 %v151, 0.2
  %v164 = vmul.f32 %v154, 0.2
  %v165 = vmul.f32 %v156, 0.2
  %v166 = vsel %vm158, %v149, %v162
  %v167 = vsel %vm159, %v151, %v163
  %v168 = vsel %vm160, %v154, %v164
  %v169 = vsel %vm161, %v156, %v165
  %v170 = vpack.c.bf16 %v166, %v166
  %v171 = vpack.c.bf16 %v167, %v167
  %v172 = vpack.c.bf16 %v168, %v168
  %v173 = vpack.c.bf16 %v169, %v169
  %vm174 = vcmask 257024
  %175 = vst.msk [vmem:[%s3] sm:$0xf] %vm174, %v170
  %176 = vst.msk [vmem:[%s3 + $0x4] sm:$0xf] %vm174, %v171
  %177 = vst.msk [vmem:[%s3 + $0x8] sm:$0xf] %vm174, %v172
  %178 = vst.msk [vmem:[%s3 + $0xc] sm:$0xf] %vm174, %v173
  // Predicated region
  $region14: #{masked_vae_forward.18} parent=0 // pred_check
    _
  $region15: #{masked_vae_forward.18} parent=0 // pred_check_branch
    %180 = sbr.rel (0) target = $region17
  $region16: #{masked_vae_forward.18} parent=0 // pred_region
    _
  $region17: #{masked_vae_forward.18} parent=0 // pred_fallthru
    _
  // Predicated region
  $region18: #{masked_vae_forward.18} parent=0 // pred_check
    _
  $region19: #{masked_vae_forward.18} parent=0 // pred_check_branch
    %182 = sbr.rel (0) target = $region21
  $region20: #{masked_vae_forward.18} parent=0 // pred_region
    _
  $region21: #{masked_vae_forward.18} parent=0 // pred_fallthru
    _

// kernel: masked_vae_forward.19
$region0: #{masked_vae_forward.19}
  #allocation0 [shape = 'u32[]', space=smem, size = 0x4, offset = 0x4, fixed_abs, tag = 'smem constant byte address 0x4 - core index']
  #allocation1 [shape = 'u32[72,128]{1,0:T(1,128)}', space=vmem, size = 0x9000, scoped, tag = 'internal scratch']
  %s0 = inlined_call_operand.vmem [shape: bf16[128,72], index: 0, kind: input, shape index: {}]
  %s1 = inlined_call_operand.vmem [shape: bf16[72,4], index: 1, kind: input, shape index: {}]
  %s2 = inlined_call_operand.vmem [shape: f32[1,4], index: 2, kind: input, shape index: {}]
  %s3 = inlined_call_operand.vmem [shape: f32[128,4], index: 3, kind: output, shape index: {}]
  %s4 = sld [smem:[#allocation0]]
  $region22: #{masked_vae_forward.19} parent=0
    _
  %s6 = ssub.s32 1, %s4
  %s7 = scalar_select 0, %s6, %s4
  // Predicated region
  $region2: #{masked_vae_forward.19} parent=0 // pred_check
    _
  $region3: #{masked_vae_forward.19} parent=0 // pred_check_branch
    %9 = sbr.rel (0) target = $region5
  $region4: #{masked_vae_forward.19} parent=0 // pred_region
    _
  $region5: #{masked_vae_forward.19} parent=0 // pred_fallthru
    _
  // Predicated region
  $region6: #{masked_vae_forward.19} parent=0 // pred_check
    _
  $region7: #{masked_vae_forward.19} parent=0 // pred_check_branch
    %11 = sbr.rel (0) target = $region9
  $region8: #{masked_vae_forward.19} parent=0 // pred_region
    _
  $region9: #{masked_vae_forward.19} parent=0 // pred_fallthru
    _
  // Predicated region
  $region10: #{masked_vae_forward.19} parent=0 // pred_check
    _
  $region11: #{masked_vae_forward.19} parent=0 // pred_check_branch
    %13 = sbr.rel (0) target = $region13
  $region12: #{masked_vae_forward.19} parent=0 // pred_region
    _
  $region13: #{masked_vae_forward.19} parent=0 // pred_fallthru
    _
  %v15 = vld [vmem:[%s0] sm:$0xf]
  %v16 = vld [vmem:[%s0 + $0x4] sm:$0xf]
  %v17 = vld [vmem:[%s0 + $0x8] sm:$0xf]
  %v18 = vld [vmem:[%s0 + $0xc] sm:$0xf]
  %v19 = vld [vmem:[%s0 + $0x10] sm:$0xf]
  %v20 = vld [vmem:[%s0 + $0x14] sm:$0xf]
  %v21 = vld [vmem:[%s0 + $0x18] sm:$0xf]
  %v22 = vld [vmem:[%s0 + $0x1c] sm:$0xf]
  %v23 = vld [vmem:[%s0 + $0x20] sm:$0xf]
  %v24 = vld [vmem:[%s0 + $0x24] sm:$0xf]
  %v25 = vld [vmem:[%s0 + $0x28] sm:$0xf]
  %v26 = vld [vmem:[%s0 + $0x2c] sm:$0xf]
  %v27 = vld [vmem:[%s0 + $0x30] sm:$0xf]
  %v28 = vld [vmem:[%s0 + $0x34] sm:$0xf]
  %v29 = vld [vmem:[%s0 + $0x38] sm:$0xf]
  %v30 = vld [vmem:[%s0 + $0x3c] sm:$0xf]
  %v31 = vld [vmem:[%s1] sm:$0xf]
  %v32 = vld [vmem:[%s1 + $0x4] sm:$0xf]
  %v33 = vld [vmem:[%s1 + $0x8] sm:$0xf]
  %v34 = vld [vmem:[%s1 + $0xc] sm:$0xf]
  %v35 = vld [vmem:[%s1 + $0x10] sm:$0xf]
  %v36 = vld [vmem:[%s1 + $0x14] sm:$0xf]
  %v37 = vld [vmem:[%s1 + $0x18] sm:$0xf]
  %v38 = vld [vmem:[%s1 + $0x1c] sm:$0xf]
  %v39 = vld [vmem:[%s1 + $0x20] sm:$0xf]
  %v40 = vld [vmem:[%s2] sm:$0x1]
  %v42 = vperm.slane %v40, 0
  %v60 = vunpack.c.l.b16 %v15
  %v61 = vunpack.c.l.b16 %v16
  %v62 = vunpack.c.l.b16 %v17
  %v63 = vunpack.c.l.b16 %v18
  %v64 = vunpack.c.l.b16 %v19
  %v65 = vunpack.c.l.b16 %v20
  %v66 = vunpack.c.l.b16 %v21
  %v67 = vunpack.c.l.b16 %v22
  %v68 = vunpack.c.l.b16 %v23
  %v69 = vunpack.c.l.b16 %v24
  %v70 = vunpack.c.l.b16 %v25
  %v71 = vunpack.c.l.b16 %v26
  %v72 = vunpack.c.l.b16 %v27
  %v73 = vunpack.c.l.b16 %v28
  %v74 = vunpack.c.l.b16 %v29
  %v75 = vunpack.c.l.b16 %v30
  %v76 = vpack.c.b16 %v61, %v60
  %v77 = vpack.c.b16 %v63, %v62
  %v78 = vpack.c.b16 %v65, %v64
  %v79 = vpack.c.b16 %v67, %v66
  %v80 = vpack.c.b16 %v69, %v68
  %v81 = vpack.c.b16 %v71, %v70
  %v82 = vpack.c.b16 %v73, %v72
  %v83 = vpack.c.b16 %v75, %v74
  %v93 = vunpack.c.l.b16 %v31
  %v94 = vunpack.c.l.b16 %v32
  %v95 = vunpack.c.l.b16 %v33
  %v96 = vunpack.c.l.b16 %v34
  %v97 = vunpack.c.l.b16 %v35
  %v98 = vunpack.c.l.b16 %v36
  %v99 = vunpack.c.l.b16 %v37
  %v100 = vunpack.c.l.b16 %v38
  %v101 = vunpack.c.l.b16 %v39
  %v102 = vpack.c.b16 %v94, %v93
  %v103 = vpack.c.b16 %v96, %v95
  %v104 = vpack.c.b16 %v98, %v97
  %v105 = vpack.c.b16 %v100, %v99
  %v106 = vpack.c.b16 %v101, %v101
  %vm111 = vcmask 588800
  %v113 = vsel %vm111, %v76, 0
  %v116 = vsel %vm111, %v77, 0
  %v119 = vsel %vm111, %v78, 0
  %v122 = vsel %vm111, %v79, 0
  %v125 = vsel %vm111, %v80, 0
  %v128 = vsel %vm111, %v81, 0
  %v131 = vsel %vm111, %v82, 0
  %v134 = vsel %vm111, %v83, 0
  %vm136 = vcmask 1043456
  %v138 = vsel %vm136, %v106, 0
  %140 = vmatpush.bf16.msra.mxu0 0
  %141 = vmatpush.bf16.msra.mxu0 0
  %142 = vmatpush.bf16.msra.mxu0 0
  %143 = vmatpush.bf16.msra.mxu0 %v138
  %144 = vmatpush.bf16.msra.mxu0 %v105
  %145 = vmatpush.bf16.msra.mxu0 %v104
  %146 = vmatpush.bf16.msra.mxu0 %v103
  %147 = vmatpush.bf16.msra.mxu0 %v102
  %148 = vmatmul.bf16.gmra.mxu0 %v113
  %v149 = vpop.f32.mrf.mxu0
  %v150 = vadd.f32 %v42, %v149
  %v151 = vpop.f32.mrf.mxu0
  %v152 = vadd.f32 %v42, %v151
  %153 = vmatmul.bf16.gmra.mxu0 %v116
  %v154 = vpop.f32.mrf.mxu0
  %v155 = vadd.f32 %v42, %v154
  %v156 = vpop.f32.mrf.mxu0
  %v157 = vadd.f32 %v42, %v156
  %158 = vmatmul.bf16.gmra.mxu0 %v119
  %v159 = vpop.f32.mrf.mxu0
  %v160 = vadd.f32 %v42, %v159
  %v161 = vpop.f32.mrf.mxu0
  %v162 = vadd.f32 %v42, %v161
  %163 = vmatmul.bf16.gmra.mxu0 %v122
  %v164 = vpop.f32.mrf.mxu0
  %v165 = vadd.f32 %v42, %v164
  %v166 = vpop.f32.mrf.mxu0
  %v167 = vadd.f32 %v42, %v166
  %168 = vmatmul.bf16.gmra.mxu0 %v125
  %v169 = vpop.f32.mrf.mxu0
  %v170 = vadd.f32 %v42, %v169
  %v171 = vpop.f32.mrf.mxu0
  %v172 = vadd.f32 %v42, %v171
  %173 = vmatmul.bf16.gmra.mxu0 %v128
  %v174 = vpop.f32.mrf.mxu0
  %v175 = vadd.f32 %v42, %v174
  %v176 = vpop.f32.mrf.mxu0
  %v177 = vadd.f32 %v42, %v176
  %178 = vmatmul.bf16.gmra.mxu0 %v131
  %v179 = vpop.f32.mrf.mxu0
  %v180 = vadd.f32 %v42, %v179
  %v181 = vpop.f32.mrf.mxu0
  %v182 = vadd.f32 %v42, %v181
  %183 = vmatmul.bf16.gmra.mxu0 %v134
  %v184 = vpop.f32.mrf.mxu0
  %v185 = vadd.f32 %v42, %v184
  %v186 = vpop.f32.mrf.mxu0
  %v187 = vadd.f32 %v42, %v186
  %188 = vdwg.mxu0
  %v189 = vxor.u32 %v150, 2147483648
  %v190 = vxor.u32 %v152, 2147483648
  %v191 = vxor.u32 %v155, 2147483648
  %v192 = vxor.u32 %v157, 2147483648
  %v193 = vxor.u32 %v160, 2147483648
  %v194 = vxor.u32 %v162, 2147483648
  %v195 = vxor.u32 %v165, 2147483648
  %v196 = vxor.u32 %v167, 2147483648
  %v197 = vxor.u32 %v170, 2147483648
  %v198 = vxor.u32 %v172, 2147483648
  %v199 = vxor.u32 %v175, 2147483648
  %v200 = vxor.u32 %v177, 2147483648
  %v201 = vxor.u32 %v180, 2147483648
  %v202 = vxor.u32 %v182, 2147483648
  %v203 = vxor.u32 %v185, 2147483648
  %v204 = vxor.u32 %v187, 2147483648
  %v205 = vmul.f32 %v189, 1.442695
  %v206 = vpow.pop %v205
  %v207 = vmul.f32 %v190, 1.442695
  %v208 = vpow.pop %v207
  %v209 = vmul.f32 %v191, 1.442695
  %v210 = vpow.pop %v209
  %v211 = vmul.f32 %v192, 1.442695
  %v212 = vpow.pop %v211
  %v213 = vmul.f32 %v193, 1.442695
  %v214 = vpow.pop %v213
  %v215 = vmul.f32 %v194, 1.442695
  %v216 = vpow.pop %v215
  %v217 = vmul.f32 %v195, 1.442695
  %v218 = vpow.pop %v217
  %v219 = vmul.f32 %v196, 1.442695
  %v220 = vpow.pop %v219
  %v221 = vmul.f32 %v197, 1.442695
  %v222 = vpow.pop %v221
  %v223 = vmul.f32 %v198, 1.442695
  %v224 = vpow.pop %v223
  %v225 = vmul.f32 %v199, 1.442695
  %v226 = vpow.pop %v225
  %v227 = vmul.f32 %v200, 1.442695
  %v228 = vpow.pop %v227
  %v229 = vmul.f32 %v201, 1.442695
  %v230 = vpow.pop %v229
  %v231 = vmul.f32 %v202, 1.442695
  %v232 = vpow.pop %v231
  %v233 = vmul.f32 %v203, 1.442695
  %v234 = vpow.pop %v233
  %v235 = vmul.f32 %v204, 1.442695
  %v236 = vpow.pop %v235
  %v237 = vadd.f32 %v206, 1.0
  %v238 = vadd.f32 %v208, 1.0
  %v239 = vadd.f32 %v210, 1.0
  %v240 = vadd.f32 %v212, 1.0
  %v241 = vadd.f32 %v214, 1.0
  %v242 = vadd.f32 %v216, 1.0
  %v243 = vadd.f32 %v218, 1.0
  %v244 = vadd.f32 %v220, 1.0
  %v245 = vadd.f32 %v222, 1.0
  %v246 = vadd.f32 %v224, 1.0
  %v247 = vadd.f32 %v226, 1.0
  %v248 = vadd.f32 %v228, 1.0
  %v249 = vadd.f32 %v230, 1.0
  %v250 = vadd.f32 %v232, 1.0
  %v251 = vadd.f32 %v234, 1.0
  %v252 = vadd.f32 %v236, 1.0
  %v253 = vrcp.pop %v237
  %v254 = vmul.f32 %v237, %v253
  %v255 = vsub.f32 1.0, %v254
  %v256 = vmul.f32 %v253, %v255
  %v257 = vadd.f32 %v253, %v256
  %vm258 = vweird.f32 %v237
  %vm259 = vweird.f32 %v253
  %vm260 = vmor %vm258, %vm259
  %v261 = vsel %vm260, %v253, %v257
  %v262 = vand.u32 2147483647, %v237
  %vm263 = vcmp.eq.f32.partialorder %v262, 8.507059e+37
  %v264 = vand.u32 %v237, 2147483648
  %v265 = vor.u32 1.1754944e-38, %v264
  %v266 = vsel %vm263, %v265, %v261
  %v267 = vmul.f32 1.0, %v266
  %v268 = vrcp.pop %v238
  %v269 = vmul.f32 %v238, %v268
  %v270 = vsub.f32 1.0, %v269
  %v271 = vmul.f32 %v268, %v270
  %v272 = vadd.f32 %v268, %v271
  %vm273 = vweird.f32 %v238
  %vm274 = vweird.f32 %v268
  %vm275 = vmor %vm273, %vm274
  %v276 = vsel %vm275, %v268, %v272
  %v277 = vand.u32 2147483647, %v238
  %vm278 = vcmp.eq.f32.partialorder %v277, 8.507059e+37
  %v279 = vand.u32 %v238, 2147483648
  %v280 = vor.u32 1.1754944e-38, %v279
  %v281 = vsel %vm278, %v280, %v276
  %v282 = vmul.f32 1.0, %v281
  %v283 = vrcp.pop %v239
  %v284 = vmul.f32 %v239, %v283
  %v285 = vsub.f32 1.0, %v284
  %v286 = vmul.f32 %v283, %v285
  %v287 = vadd.f32 %v283, %v286
  %vm288 = vweird.f32 %v239
  %vm289 = vweird.f32 %v283
  %vm290 = vmor %vm288, %vm289
  %v291 = vsel %vm290, %v283, %v287
  %v292 = vand.u32 2147483647, %v239
  %vm293 = vcmp.eq.f32.partialorder %v292, 8.507059e+37
  %v294 = vand.u32 %v239, 2147483648
  %v295 = vor.u32 1.1754944e-38, %v294
  %v296 = vsel %vm293, %v295, %v291
  %v297 = vmul.f32 1.0, %v296
  %v298 = vrcp.pop %v240
  %v299 = vmul.f32 %v240, %v298
  %v300 = vsub.f32 1.0, %v299
  %v301 = vmul.f32 %v298, %v300
  %v302 = vadd.f32 %v298, %v301
  %vm303 = vweird.f32 %v240
  %vm304 = vweird.f32 %v298
  %vm305 = vmor %vm303, %vm304
  %v306 = vsel %vm305, %v298, %v302
  %v307 = vand.u32 2147483647, %v240
  %vm308 = vcmp.eq.f32.partialorder %v307, 8.507059e+37
  %v309 = vand.u32 %v240, 2147483648
  %v310 = vor.u32 1.1754944e-38, %v309
  %v311 = vsel %vm308, %v310, %v306
  %v312 = vmul.f32 1.0, %v311
  %v313 = vrcp.pop %v241
  %v314 = vmul.f32 %v241, %v313
  %v315 = vsub.f32 1.0, %v314
  %v316 = vmul.f32 %v313, %v315
  %v317 = vadd.f32 %v313, %v316
  %vm318 = vweird.f32 %v241
  %vm319 = vweird.f32 %v313
  %vm320 = vmor %vm318, %vm319
  %v321 = vsel %vm320, %v313, %v317
  %v322 = vand.u32 2147483647, %v241
  %vm323 = vcmp.eq.f32.partialorder %v322, 8.507059e+37
  %v324 = vand.u32 %v241, 2147483648
  %v325 = vor.u32 1.1754944e-38, %v324
  %v326 = vsel %vm323, %v325, %v321
  %v327 = vmul.f32 1.0, %v326
  %v328 = vrcp.pop %v242
  %v329 = vmul.f32 %v242, %v328
  %v330 = vsub.f32 1.0, %v329
  %v331 = vmul.f32 %v328, %v330
  %v332 = vadd.f32 %v328, %v331
  %vm333 = vweird.f32 %v242
  %vm334 = vweird.f32 %v328
  %vm335 = vmor %vm333, %vm334
  %v336 = vsel %vm335, %v328, %v332
  %v337 = vand.u32 2147483647, %v242
  %vm338 = vcmp.eq.f32.partialorder %v337, 8.507059e+37
  %v339 = vand.u32 %v242, 2147483648
  %v340 = vor.u32 1.1754944e-38, %v339
  %v341 = vsel %vm338, %v340, %v336
  %v342 = vmul.f32 1.0, %v341
  %v343 = vrcp.pop %v243
  %v344 = vmul.f32 %v243, %v343
  %v345 = vsub.f32 1.0, %v344
  %v346 = vmul.f32 %v343, %v345
  %v347 = vadd.f32 %v343, %v346
  %vm348 = vweird.f32 %v243
  %vm349 = vweird.f32 %v343
  %vm350 = vmor %vm348, %vm349
  %v351 = vsel %vm350, %v343, %v347
  %v352 = vand.u32 2147483647, %v243
  %vm353 = vcmp.eq.f32.partialorder %v352, 8.507059e+37
  %v354 = vand.u32 %v243, 2147483648
  %v355 = vor.u32 1.1754944e-38, %v354
  %v356 = vsel %vm353, %v355, %v351
  %v357 = vmul.f32 1.0, %v356
  %v358 = vrcp.pop %v244
  %v359 = vmul.f32 %v244, %v358
  %v360 = vsub.f32 1.0, %v359
  %v361 = vmul.f32 %v358, %v360
  %v362 = vadd.f32 %v358, %v361
  %vm363 = vweird.f32 %v244
  %vm364 = vweird.f32 %v358
  %vm365 = vmor %vm363, %vm364
  %v366 = vsel %vm365, %v358, %v362
  %v367 = vand.u32 2147483647, %v244
  %vm368 = vcmp.eq.f32.partialorder %v367, 8.507059e+37
  %v369 = vand.u32 %v244, 2147483648
  %v370 = vor.u32 1.1754944e-38, %v369
  %v371 = vsel %vm368, %v370, %v366
  %v372 = vmul.f32 1.0, %v371
  %v373 = vrcp.pop %v245
  %v374 = vmul.f32 %v245, %v373
  %v375 = vsub.f32 1.0, %v374
  %v376 = vmul.f32 %v373, %v375
  %v377 = vadd.f32 %v373, %v376
  %vm378 = vweird.f32 %v245
  %vm379 = vweird.f32 %v373
  %vm380 = vmor %vm378, %vm379
  %v381 = vsel %vm380, %v373, %v377
  %v382 = vand.u32 2147483647, %v245
  %vm383 = vcmp.eq.f32.partialorder %v382, 8.507059e+37
  %v384 = vand.u32 %v245, 2147483648
  %v385 = vor.u32 1.1754944e-38, %v384
  %v386 = vsel %vm383, %v385, %v381
  %v387 = vmul.f32 1.0, %v386
  %v388 = vrcp.pop %v246
  %v389 = vmul.f32 %v246, %v388
  %v390 = vsub.f32 1.0, %v389
  %v391 = vmul.f32 %v388, %v390
  %v392 = vadd.f32 %v388, %v391
  %vm393 = vweird.f32 %v246
  %vm394 = vweird.f32 %v388
  %vm395 = vmor %vm393, %vm394
  %v396 = vsel %vm395, %v388, %v392
  %v397 = vand.u32 2147483647, %v246
  %vm398 = vcmp.eq.f32.partialorder %v397, 8.507059e+37
  %v399 = vand.u32 %v246, 2147483648
  %v400 = vor.u32 1.1754944e-38, %v399
  %v401 = vsel %vm398, %v400, %v396
  %v402 = vmul.f32 1.0, %v401
  %v403 = vrcp.pop %v247
  %v404 = vmul.f32 %v247, %v403
  %v405 = vsub.f32 1.0, %v404
  %v406 = vmul.f32 %v403, %v405
  %v407 = vadd.f32 %v403, %v406
  %vm408 = vweird.f32 %v247
  %vm409 = vweird.f32 %v403
  %vm410 = vmor %vm408, %vm409
  %v411 = vsel %vm410, %v403, %v407
  %v412 = vand.u32 2147483647, %v247
  %vm413 = vcmp.eq.f32.partialorder %v412, 8.507059e+37
  %v414 = vand.u32 %v247, 2147483648
  %v415 = vor.u32 1.1754944e-38, %v414
  %v416 = vsel %vm413, %v415, %v411
  %v417 = vmul.f32 1.0, %v416
  %v418 = vrcp.pop %v248
  %v419 = vmul.f32 %v248, %v418
  %v420 = vsub.f32 1.0, %v419
  %v421 = vmul.f32 %v418, %v420
  %v422 = vadd.f32 %v418, %v421
  %vm423 = vweird.f32 %v248
  %vm424 = vweird.f32 %v418
  %vm425 = vmor %vm423, %vm424
  %v426 = vsel %vm425, %v418, %v422
  %v427 = vand.u32 2147483647, %v248
  %vm428 = vcmp.eq.f32.partialorder %v427, 8.507059e+37
  %v429 = vand.u32 %v248, 2147483648
  %v430 = vor.u32 1.1754944e-38, %v429
  %v431 = vsel %vm428, %v430, %v426
  %v432 = vmul.f32 1.0, %v431
  %v433 = vrcp.pop %v249
  %v434 = vmul.f32 %v249, %v433
  %v435 = vsub.f32 1.0, %v434
  %v436 = vmul.f32 %v433, %v435
  %v437 = vadd.f32 %v433, %v436
  %vm438 = vweird.f32 %v249
  %vm439 = vweird.f32 %v433
  %vm440 = vmor %vm438, %vm439
  %v441 = vsel %vm440, %v433, %v437
  %v442 = vand.u32 2147483647, %v249
  %vm443 = vcmp.eq.f32.partialorder %v442, 8.507059e+37
  %v444 = vand.u32 %v249, 2147483648
  %v445 = vor.u32 1.1754944e-38, %v444
  %v446 = vsel %vm443, %v445, %v441
  %v447 = vmul.f32 1.0, %v446
  %v448 = vrcp.pop %v250
  %v449 = vmul.f32 %v250, %v448
  %v450 = vsub.f32 1.0, %v449
  %v451 = vmul.f32 %v448, %v450
  %v452 = vadd.f32 %v448, %v451
  %vm453 = vweird.f32 %v250
  %vm454 = vweird.f32 %v448
  %vm455 = vmor %vm453, %vm454
  %v456 = vsel %vm455, %v448, %v452
  %v457 = vand.u32 2147483647, %v250
  %vm458 = vcmp.eq.f32.partialorder %v457, 8.507059e+37
  %v459 = vand.u32 %v250, 2147483648
  %v460 = vor.u32 1.1754944e-38, %v459
  %v461 = vsel %vm458, %v460, %v456
  %v462 = vmul.f32 1.0, %v461
  %v463 = vrcp.pop %v251
  %v464 = vmul.f32 %v251, %v463
  %v465 = vsub.f32 1.0, %v464
  %v466 = vmul.f32 %v463, %v465
  %v467 = vadd.f32 %v463, %v466
  %vm468 = vweird.f32 %v251
  %vm469 = vweird.f32 %v463
  %vm470 = vmor %vm468, %vm469
  %v471 = vsel %vm470, %v463, %v467
  %v472 = vand.u32 2147483647, %v251
  %vm473 = vcmp.eq.f32.partialorder %v472, 8.507059e+37
  %v474 = vand.u32 %v251, 2147483648
  %v475 = vor.u32 1.1754944e-38, %v474
  %v476 = vsel %vm473, %v475, %v471
  %v477 = vmul.f32 1.0, %v476
  %v478 = vrcp.pop %v252
  %v479 = vmul.f32 %v252, %v478
  %v480 = vsub.f32 1.0, %v479
  %v481 = vmul.f32 %v478, %v480
  %v482 = vadd.f32 %v478, %v481
  %vm483 = vweird.f32 %v252
  %vm484 = vweird.f32 %v478
  %vm485 = vmor %vm483, %vm484
  %v486 = vsel %vm485, %v478, %v482
  %v487 = vand.u32 2147483647, %v252
  %vm488 = vcmp.eq.f32.partialorder %v487, 8.507059e+37
  %v489 = vand.u32 %v252, 2147483648
  %v490 = vor.u32 1.1754944e-38, %v489
  %v491 = vsel %vm488, %v490, %v486
  %v492 = vmul.f32 1.0, %v491
  %v493 = vmax.f32 %v267, 0.0
  %v494 = vmax.f32 %v282, 0.0
  %v495 = vmax.f32 %v297, 0.0
  %v496 = vmax.f32 %v312, 0.0
  %v497 = vmax.f32 %v327, 0.0
  %v498 = vmax.f32 %v342, 0.0
  %v499 = vmax.f32 %v357, 0.0
  %v500 = vmax.f32 %v372, 0.0
  %v501 = vmax.f32 %v387, 0.0
  %v502 = vmax.f32 %v402, 0.0
  %v503 = vmax.f32 %v417, 0.0
  %v504 = vmax.f32 %v432, 0.0
  %v505 = vmax.f32 %v447, 0.0
  %v506 = vmax.f32 %v462, 0.0
  %v507 = vmax.f32 %v477, 0.0
  %v508 = vmax.f32 %v492, 0.0
  %v509 = vmin.f32 %v493, 1.0
  %v510 = vmin.f32 %v494, 1.0
  %v511 = vmin.f32 %v495, 1.0
  %v512 = vmin.f32 %v496, 1.0
  %v513 = vmin.f32 %v497, 1.0
  %v514 = vmin.f32 %v498, 1.0
  %v515 = vmin.f32 %v499, 1.0
  %v516 = vmin.f32 %v500, 1.0
  %v517 = vmin.f32 %v501, 1.0
  %v518 = vmin.f32 %v502, 1.0
  %v519 = vmin.f32 %v503, 1.0
  %v520 = vmin.f32 %v504, 1.0
  %v521 = vmin.f32 %v505, 1.0
  %v522 = vmin.f32 %v506, 1.0
  %v523 = vmin.f32 %v507, 1.0
  %v524 = vmin.f32 %v508, 1.0
  %vm525 = vcmask 31744
  %526 = vst.msk [vmem:[%s3] sm:$0xff] %vm525, %v509
  %527 = vst.msk [vmem:[%s3 + $0x8] sm:$0xff] %vm525, %v510
  %528 = vst.msk [vmem:[%s3 + $0x10] sm:$0xff] %vm525, %v511
  %529 = vst.msk [vmem:[%s3 + $0x18] sm:$0xff] %vm525, %v512
  %530 = vst.msk [vmem:[%s3 + $0x20] sm:$0xff] %vm525, %v513
  %531 = vst.msk [vmem:[%s3 + $0x28] sm:$0xff] %vm525, %v514
  %532 = vst.msk [vmem:[%s3 + $0x30] sm:$0xff] %vm525, %v515
  %533 = vst.msk [vmem:[%s3 + $0x38] sm:$0xff] %vm525, %v516
  %534 = vst.msk [vmem:[%s3 + $0x40] sm:$0xff] %vm525, %v517
  %535 = vst.msk [vmem:[%s3 + $0x48] sm:$0xff] %vm525, %v518
  %536 = vst.msk [vmem:[%s3 + $0x50] sm:$0xff] %vm525, %v519
  %537 = vst.msk [vmem:[%s3 + $0x58] sm:$0xff] %vm525, %v520
  %538 = vst.msk [vmem:[%s3 + $0x60] sm:$0xff] %vm525, %v521
  %539 = vst.msk [vmem:[%s3 + $0x68] sm:$0xff] %vm525, %v522
  %540 = vst.msk [vmem:[%s3 + $0x70] sm:$0xff] %vm525, %v523
  %541 = vst.msk [vmem:[%s3 + $0x78] sm:$0xff] %vm525, %v524
  // Predicated region
  $region14: #{masked_vae_forward.19} parent=0 // pred_check
    _
  $region15: #{masked_vae_forward.19} parent=0 // pred_check_branch
    %543 = sbr.rel (0) target = $region17
  $region16: #{masked_vae_forward.19} parent=0 // pred_region
    _
  $region17: #{masked_vae_forward.19} parent=0 // pred_fallthru
    _
  // Predicated region
  $region18: #{masked_vae_forward.19} parent=0 // pred_check
    _
  $region19: #{masked_vae_forward.19} parent=0 // pred_check_branch
    %545 = sbr.rel (0) target = $region21
  $region20: #{masked_vae_forward.19} parent=0 // pred_region
    _
  $region21: #{masked_vae_forward.19} parent=0 // pred_fallthru
    _

</llo_original>
